<compile_context>
chip_gen: v7x
topology: tpu7x:2x2x1
jax: 0.10.0
libtpu: 0.0.40
codegen_flags: <defaults>
</compile_context>

<pallas_src>
import jax
import jax.numpy as jnp
from jax.experimental import pallas as pl
from jax.experimental.pallas import tpu as pltpu

BN_EPS = 1e-5
ENC_DIMS = [64, 64, 64, 128, 1024]   # fc_enc output channels per layer
HEAD_DIMS = [512, 256, 128, 40]      # fc output channels per layer (embedding_size=40)


def _round_up(x, m):
    return int(pl.cdiv(x, m)) * m


def _lin_relu_bn(x_f32, w_bf16, b, scale, shift):
    # bf16 matmul inputs, f32 MXU accumulation; ReLU/BN in f32.
    h = jnp.dot(x_f32.astype(jnp.bfloat16), w_bf16,
                preferred_element_type=jnp.float32) + b
    h = jnp.maximum(h, 0.0)
    return h * scale + shift


# -------- Kernel 1: per-point encoder MLP (fc_enc) + fused global max pool --------
def encoder_pool_kernel(x_ref, bids_ref, *refs):
    feat_ref, pool_ref = refs[-2], refs[-1]
    params = refs[:-2]                      # 5 layers * (w, b, scale, shift)

    h = x_ref[...]                          # [tile_n, c_in] f32
    for l in range(5):
        w, b, s, sh = params[4 * l: 4 * l + 4]
        h = _lin_relu_bn(h, w[...], b[...], s[...], sh[...])
    feat_ref[...] = h                       # per-point embedding (self.embedding)

    # Fused global max pool: resident accumulator, init on first grid step.
    @pl.when(pl.program_id(0) == 0)
    def _():
        pool_ref[...] = jnp.full(pool_ref.shape, -jnp.inf, dtype=pool_ref.dtype)

    bids = bids_ref[...]                    # [tile_n, 1] int32 (padded rows = -1)
    b_pad = pool_ref.shape[0]               # static, small (padded to 8)
    rows = []
    for g in range(b_pad):                  # static unrolled loop over graphs
        vals = jnp.where(bids == g, h, -jnp.inf)
        rows.append(jnp.max(vals, axis=0, keepdims=True))
    tile_max = jnp.concatenate(rows, axis=0)        # [b_pad, 1024]
    pool_ref[...] = jnp.maximum(pool_ref[...], tile_max)


def run_encoder_pool(x, batch, num_graphs, enc_params, tile_n=256):
    n, c_in = x.shape
    tile_n = min(tile_n, _round_up(n, 8))   # adaptive: small inputs get one tile
    n_pad = _round_up(n, tile_n)
    b_pad = _round_up(max(num_graphs, 1), 8)

    if n_pad != n:
        x = jnp.pad(x, ((0, n_pad - n), (0, 0)))
        batch = jnp.pad(batch, (0, n_pad - n), constant_values=-1)
    bids = batch.reshape(n_pad, 1).astype(jnp.int32)

    flat = []
    in_specs = [pl.BlockSpec((tile_n, c_in), lambda i: (i, 0)),
                pl.BlockSpec((tile_n, 1), lambda i: (i, 0))]
    for (w, b, s, sh) in enc_params:
        for p in (w, b, s, sh):
            flat.append(p)
            in_specs.append(pl.BlockSpec(p.shape, lambda i: (0, 0)))

    feat, pooled = pl.pallas_call(
        encoder_pool_kernel,
        out_shape=(jax.ShapeDtypeStruct((n_pad, ENC_DIMS[-1]), jnp.float32),
                   jax.ShapeDtypeStruct((b_pad, ENC_DIMS[-1]), jnp.float32)),
        grid=(n_pad // tile_n,),
        in_specs=in_specs,
        out_specs=(pl.BlockSpec((tile_n, ENC_DIMS[-1]), lambda i: (i, 0)),
                   pl.BlockSpec((b_pad, ENC_DIMS[-1]), lambda i: (0, 0))),
        compiler_params=pltpu.CompilerParams(
            dimension_semantics=("arbitrary",)),   # accumulator revisited each step
    )(x, bids, *flat)
    return feat[:n], pooled[:num_graphs]


# -------- Kernel 2: head MLP (fc) + classifier (fc_cls), tiny B so single block --------
def head_kernel(emb_ref, *refs):
    o_ref = refs[-1]
    params = refs[:-1]                      # 4*(w,b,scale,shift) + (w_cls, b_cls)
    h = emb_ref[...]
    for l in range(4):
        w, b, s, sh = params[4 * l: 4 * l + 4]
        h = _lin_relu_bn(h, w[...], b[...], s[...], sh[...])
    w_cls, b_cls = params[16], params[17]
    o_ref[...] = jnp.dot(h.astype(jnp.bfloat16), w_cls[...],
                         preferred_element_type=jnp.float32) + b_cls[...]


def run_head(pooled, head_params, cls_w, cls_b, n_classes):
    b_graphs, c = pooled.shape
    flat = []
    in_specs = [pl.BlockSpec((b_graphs, c), lambda i: (0, 0))]
    for (w, bb, s, sh) in head_params:
        for p in (w, bb, s, sh):
            flat.append(p)
            in_specs.append(pl.BlockSpec(p.shape, lambda i: (0, 0)))
    for p in (cls_w, cls_b):
        flat.append(p)
        in_specs.append(pl.BlockSpec(p.shape, lambda i: (0, 0)))
    return pl.pallas_call(
        head_kernel,
        out_shape=jax.ShapeDtypeStruct((b_graphs, n_classes), jnp.float32),
        grid=(1,),
        in_specs=in_specs,
        out_specs=pl.BlockSpec((b_graphs, n_classes), lambda i: (0, 0)),
    )(pooled, *flat)


# ---------------- Parameter init (deterministic, synthetic) ----------------
def init_linear(key, c_in, c_out):
    kw, kb = jax.random.split(key)
    w = jax.random.normal(kw, (c_in, c_out), jnp.float32) / jnp.sqrt(jnp.float32(c_in))
    b = 0.01 * jax.random.normal(kb, (1, c_out), jnp.float32)
    return w.astype(jnp.bfloat16), b        # weights stored bf16 for the MXU


def init_bn(key, c):
    kg, kb, km, kv = jax.random.split(key, 4)
    gamma = 1.0 + 0.1 * jax.random.normal(kg, (1, c), jnp.float32)
    beta = 0.1 * jax.random.normal(kb, (1, c), jnp.float32)
    mean = 0.1 * jax.random.normal(km, (1, c), jnp.float32)
    var = 1.0 + 0.1 * jax.random.uniform(kv, (1, c), jnp.float32)
    scale = gamma / jnp.sqrt(var + BN_EPS)
    shift = beta - mean * scale
    return scale, shift


def build_params(input_size, n_classes, key):
    keys = jax.random.split(key, 32)
    ki = 0
    enc_params, head_params = [], []
    dims = [input_size] + ENC_DIMS
    for i in range(1, len(dims)):
        w, b = init_linear(keys[ki], dims[i - 1], dims[i]); ki += 1
        s, sh = init_bn(keys[ki], dims[i]); ki += 1
        enc_params.append((w, b, s, sh))
    dims = [ENC_DIMS[-1]] + HEAD_DIMS
    for i in range(1, len(dims)):
        w, b = init_linear(keys[ki], dims[i - 1], dims[i]); ki += 1
        s, sh = init_bn(keys[ki], dims[i]); ki += 1
        head_params.append((w, b, s, sh))
    cls_w, cls_b = init_linear(keys[ki], HEAD_DIMS[-1], n_classes)
    return enc_params, head_params, cls_w, cls_b


# ---------------- Full forward + pure-JAX reference ----------------
def pn_forward(x, batch, num_graphs, enc_params, head_params, cls_w, cls_b, n_classes):
    feat, pooled = run_encoder_pool(x, batch, num_graphs, enc_params)  # [N,1024], [B,1024]
    logits = run_head(pooled, head_params, cls_w, cls_b, n_classes)    # [B, n_classes]
    return logits, feat


def ref_forward(x, batch, num_graphs, enc_params, head_params, cls_w, cls_b):
    def block(h, w, b, s, sh):
        y = jnp.dot(h.astype(jnp.bfloat16), w, preferred_element_type=jnp.float32) + b
        return jnp.maximum(y, 0.0) * s + sh

    h = x
    for w, b, s, sh in enc_params:
        h = block(h, w, b, s, sh)
    pooled = jnp.stack(
        [jnp.max(jnp.where((batch == g)[:, None], h, -jnp.inf), axis=0)
         for g in range(num_graphs)], axis=0)
    z = pooled
    for w, b, s, sh in head_params:
        z = block(z, w, b, s, sh)
    logits = jnp.dot(z.astype(jnp.bfloat16), cls_w,
                     preferred_element_type=jnp.float32) + cls_b
    return logits, h


if __name__ == "__main__":
    input_size = 3
    n_classes = 10
    num_graphs = 2
    pts_per_graph = 16
    n_points = num_graphs * pts_per_graph            # 32 points total

    kx, kp = jax.random.split(jax.random.PRNGKey(0))
    x = jax.random.normal(kx, (n_points, input_size), jnp.float32)
    batch = jnp.repeat(jnp.arange(num_graphs, dtype=jnp.int32), pts_per_graph)

    enc_params, head_params, cls_w, cls_b = build_params(input_size, n_classes,
                                                         jax.random.PRNGKey(42))

    logits, emb = pn_forward(x, batch, num_graphs, enc_params, head_params,
                             cls_w, cls_b, n_classes)
    logits = jax.block_until_ready(logits)
    emb = jax.block_until_ready(emb)

    ref_logits, ref_emb = ref_forward(x, batch, num_graphs, enc_params,
                                      head_params, cls_w, cls_b)
    assert logits.shape == (num_graphs, n_classes)
    assert emb.shape == (n_points, ENC_DIMS[-1])
    assert bool(jnp.allclose(emb, ref_emb, rtol=2e-3, atol=2e-3)), "embedding mismatch"
    assert bool(jnp.allclose(logits, ref_logits, rtol=2e-3, atol=2e-3)), "logits mismatch"

    print("KERNEL_OK")
</pallas_src>

<mosaic_0001>
module attributes {stable_mosaic.version = 11 : i64} {
  func.func @encoder_pool_kernel(%arg0: i32, %arg1: memref<32x3xf32, #tpu.memory_space<vmem>>, %arg2: memref<32x1xi32, #tpu.memory_space<vmem>>, %arg3: memref<3x64xbf16, #tpu.memory_space<vmem>>, %arg4: memref<1x64xf32, #tpu.memory_space<vmem>>, %arg5: memref<1x64xf32, #tpu.memory_space<vmem>>, %arg6: memref<1x64xf32, #tpu.memory_space<vmem>>, %arg7: memref<64x64xbf16, #tpu.memory_space<vmem>>, %arg8: memref<1x64xf32, #tpu.memory_space<vmem>>, %arg9: memref<1x64xf32, #tpu.memory_space<vmem>>, %arg10: memref<1x64xf32, #tpu.memory_space<vmem>>, %arg11: memref<64x64xbf16, #tpu.memory_space<vmem>>, %arg12: memref<1x64xf32, #tpu.memory_space<vmem>>, %arg13: memref<1x64xf32, #tpu.memory_space<vmem>>, %arg14: memref<1x64xf32, #tpu.memory_space<vmem>>, %arg15: memref<64x128xbf16, #tpu.memory_space<vmem>>, %arg16: memref<1x128xf32, #tpu.memory_space<vmem>>, %arg17: memref<1x128xf32, #tpu.memory_space<vmem>>, %arg18: memref<1x128xf32, #tpu.memory_space<vmem>>, %arg19: memref<128x1024xbf16, #tpu.memory_space<vmem>>, %arg20: memref<1x1024xf32, #tpu.memory_space<vmem>>, %arg21: memref<1x1024xf32, #tpu.memory_space<vmem>>, %arg22: memref<1x1024xf32, #tpu.memory_space<vmem>>, %arg23: memref<32x1024xf32, #tpu.memory_space<vmem>>, %arg24: memref<8x1024xf32, #tpu.memory_space<vmem>>) attributes {dimension_semantics = [#tpu.dimension_semantics<arbitrary>], iteration_bounds = array<i64: 1>, scalar_prefetch = 0 : i64, scratch_operands = 0 : i64, tpu.core_type = #tpu.core_type<tc>, window_params = [{transform_indices = @transform_0, window_bounds = array<i64: 32, 3>}, {transform_indices = @transform_1, window_bounds = array<i64: 32, 1>}, {pipeline_mode = #tpu.pipeline_mode<synchronous>, transform_indices = @transform_2, window_bounds = array<i64: 3, 64>}, {pipeline_mode = #tpu.pipeline_mode<synchronous>, transform_indices = @transform_3, window_bounds = array<i64: 1, 64>}, {pipeline_mode = #tpu.pipeline_mode<synchronous>, transform_indices = @transform_4, window_bounds = array<i64: 1, 64>}, {pipeline_mode = #tpu.pipeline_mode<synchronous>, transform_indices = @transform_5, window_bounds = array<i64: 1, 64>}, {pipeline_mode = #tpu.pipeline_mode<synchronous>, transform_indices = @transform_6, window_bounds = array<i64: 64, 64>}, {pipeline_mode = #tpu.pipeline_mode<synchronous>, transform_indices = @transform_7, window_bounds = array<i64: 1, 64>}, {pipeline_mode = #tpu.pipeline_mode<synchronous>, transform_indices = @transform_8, window_bounds = array<i64: 1, 64>}, {pipeline_mode = #tpu.pipeline_mode<synchronous>, transform_indices = @transform_9, window_bounds = array<i64: 1, 64>}, {pipeline_mode = #tpu.pipeline_mode<synchronous>, transform_indices = @transform_10, window_bounds = array<i64: 64, 64>}, {pipeline_mode = #tpu.pipeline_mode<synchronous>, transform_indices = @transform_11, window_bounds = array<i64: 1, 64>}, {pipeline_mode = #tpu.pipeline_mode<synchronous>, transform_indices = @transform_12, window_bounds = array<i64: 1, 64>}, {pipeline_mode = #tpu.pipeline_mode<synchronous>, transform_indices = @transform_13, window_bounds = array<i64: 1, 64>}, {pipeline_mode = #tpu.pipeline_mode<synchronous>, transform_indices = @transform_14, window_bounds = array<i64: 64, 128>}, {pipeline_mode = #tpu.pipeline_mode<synchronous>, transform_indices = @transform_15, window_bounds = array<i64: 1, 128>}, {pipeline_mode = #tpu.pipeline_mode<synchronous>, transform_indices = @transform_16, window_bounds = array<i64: 1, 128>}, {pipeline_mode = #tpu.pipeline_mode<synchronous>, transform_indices = @transform_17, window_bounds = array<i64: 1, 128>}, {pipeline_mode = #tpu.pipeline_mode<synchronous>, transform_indices = @transform_18, window_bounds = array<i64: 128, 1024>}, {pipeline_mode = #tpu.pipeline_mode<synchronous>, transform_indices = @transform_19, window_bounds = array<i64: 1, 1024>}, {pipeline_mode = #tpu.pipeline_mode<synchronous>, transform_indices = @transform_20, window_bounds = array<i64: 1, 1024>}, {pipeline_mode = #tpu.pipeline_mode<synchronous>, transform_indices = @transform_21, window_bounds = array<i64: 1, 1024>}, {transform_indices = @transform_22, window_bounds = array<i64: 32, 1024>}, {pipeline_mode = #tpu.pipeline_mode<synchronous>, transform_indices = @transform_23, window_bounds = array<i64: 8, 1024>}]} {
    %c0 = arith.constant 0 : index
    %c0_0 = arith.constant 0 : index
    %0 = vector.load %arg1[%c0, %c0_0] : memref<32x3xf32, #tpu.memory_space<vmem>>, vector<32x3xf32>
    %c0_1 = arith.constant 0 : index
    %c0_2 = arith.constant 0 : index
    %1 = vector.load %arg3[%c0_1, %c0_2] : memref<3x64xbf16, #tpu.memory_space<vmem>>, vector<3x64xbf16>
    %c0_3 = arith.constant 0 : index
    %c0_4 = arith.constant 0 : index
    %2 = vector.load %arg4[%c0_3, %c0_4] : memref<1x64xf32, #tpu.memory_space<vmem>>, vector<1x64xf32>
    %c0_5 = arith.constant 0 : index
    %c0_6 = arith.constant 0 : index
    %3 = vector.load %arg5[%c0_5, %c0_6] : memref<1x64xf32, #tpu.memory_space<vmem>>, vector<1x64xf32>
    %c0_7 = arith.constant 0 : index
    %c0_8 = arith.constant 0 : index
    %4 = vector.load %arg6[%c0_7, %c0_8] : memref<1x64xf32, #tpu.memory_space<vmem>>, vector<1x64xf32>
    %5 = arith.truncf %0 : vector<32x3xf32> to vector<32x3xbf16>
    %cst = arith.constant dense<0.000000e+00> : vector<32x64xf32>
    %6 = tpu.matmul %5, %1, %cst {dimension_numbers = #tpu.dot_dimension_numbers<[1], [0], [0], [1], [0, 0, 1, 1], [], []>} : vector<32x3xbf16>, vector<3x64xbf16>, vector<32x64xf32> -> vector<32x64xf32>
    %7 = vector.broadcast %2 : vector<1x64xf32> to vector<32x64xf32>
    %8 = arith.addf %6, %7 : vector<32x64xf32>
    %cst_9 = arith.constant 0.000000e+00 : f32
    %9 = vector.broadcast %cst_9 : f32 to vector<32x64xf32>
    %10 = arith.maximumf %8, %9 : vector<32x64xf32>
    %11 = vector.broadcast %3 : vector<1x64xf32> to vector<32x64xf32>
    %12 = arith.mulf %10, %11 : vector<32x64xf32>
    %13 = vector.broadcast %4 : vector<1x64xf32> to vector<32x64xf32>
    %14 = arith.addf %12, %13 : vector<32x64xf32>
    %c0_10 = arith.constant 0 : index
    %c0_11 = arith.constant 0 : index
    %15 = vector.load %arg7[%c0_10, %c0_11] : memref<64x64xbf16, #tpu.memory_space<vmem>>, vector<64x64xbf16>
    %c0_12 = arith.constant 0 : index
    %c0_13 = arith.constant 0 : index
    %16 = vector.load %arg8[%c0_12, %c0_13] : memref<1x64xf32, #tpu.memory_space<vmem>>, vector<1x64xf32>
    %c0_14 = arith.constant 0 : index
    %c0_15 = arith.constant 0 : index
    %17 = vector.load %arg9[%c0_14, %c0_15] : memref<1x64xf32, #tpu.memory_space<vmem>>, vector<1x64xf32>
    %c0_16 = arith.constant 0 : index
    %c0_17 = arith.constant 0 : index
    %18 = vector.load %arg10[%c0_16, %c0_17] : memref<1x64xf32, #tpu.memory_space<vmem>>, vector<1x64xf32>
    %19 = arith.truncf %14 : vector<32x64xf32> to vector<32x64xbf16>
    %cst_18 = arith.constant dense<0.000000e+00> : vector<32x64xf32>
    %20 = tpu.matmul %19, %15, %cst_18 {dimension_numbers = #tpu.dot_dimension_numbers<[1], [0], [0], [1], [0, 0, 1, 1], [], []>} : vector<32x64xbf16>, vector<64x64xbf16>, vector<32x64xf32> -> vector<32x64xf32>
    %21 = vector.broadcast %16 : vector<1x64xf32> to vector<32x64xf32>
    %22 = arith.addf %20, %21 : vector<32x64xf32>
    %cst_19 = arith.constant 0.000000e+00 : f32
    %23 = vector.broadcast %cst_19 : f32 to vector<32x64xf32>
    %24 = arith.maximumf %22, %23 : vector<32x64xf32>
    %25 = vector.broadcast %17 : vector<1x64xf32> to vector<32x64xf32>
    %26 = arith.mulf %24, %25 : vector<32x64xf32>
    %27 = vector.broadcast %18 : vector<1x64xf32> to vector<32x64xf32>
    %28 = arith.addf %26, %27 : vector<32x64xf32>
    %c0_20 = arith.constant 0 : index
    %c0_21 = arith.constant 0 : index
    %29 = vector.load %arg11[%c0_20, %c0_21] : memref<64x64xbf16, #tpu.memory_space<vmem>>, vector<64x64xbf16>
    %c0_22 = arith.constant 0 : index
    %c0_23 = arith.constant 0 : index
    %30 = vector.load %arg12[%c0_22, %c0_23] : memref<1x64xf32, #tpu.memory_space<vmem>>, vector<1x64xf32>
    %c0_24 = arith.constant 0 : index
    %c0_25 = arith.constant 0 : index
    %31 = vector.load %arg13[%c0_24, %c0_25] : memref<1x64xf32, #tpu.memory_space<vmem>>, vector<1x64xf32>
    %c0_26 = arith.constant 0 : index
    %c0_27 = arith.constant 0 : index
    %32 = vector.load %arg14[%c0_26, %c0_27] : memref<1x64xf32, #tpu.memory_space<vmem>>, vector<1x64xf32>
    %33 = arith.truncf %28 : vector<32x64xf32> to vector<32x64xbf16>
    %cst_28 = arith.constant dense<0.000000e+00> : vector<32x64xf32>
    %34 = tpu.matmul %33, %29, %cst_28 {dimension_numbers = #tpu.dot_dimension_numbers<[1], [0], [0], [1], [0, 0, 1, 1], [], []>} : vector<32x64xbf16>, vector<64x64xbf16>, vector<32x64xf32> -> vector<32x64xf32>
    %35 = vector.broadcast %30 : vector<1x64xf32> to vector<32x64xf32>
    %36 = arith.addf %34, %35 : vector<32x64xf32>
    %cst_29 = arith.constant 0.000000e+00 : f32
    %37 = vector.broadcast %cst_29 : f32 to vector<32x64xf32>
    %38 = arith.maximumf %36, %37 : vector<32x64xf32>
    %39 = vector.broadcast %31 : vector<1x64xf32> to vector<32x64xf32>
    %40 = arith.mulf %38, %39 : vector<32x64xf32>
    %41 = vector.broadcast %32 : vector<1x64xf32> to vector<32x64xf32>
    %42 = arith.addf %40, %41 : vector<32x64xf32>
    %c0_30 = arith.constant 0 : index
    %c0_31 = arith.constant 0 : index
    %43 = vector.load %arg15[%c0_30, %c0_31] : memref<64x128xbf16, #tpu.memory_space<vmem>>, vector<64x128xbf16>
    %c0_32 = arith.constant 0 : index
    %c0_33 = arith.constant 0 : index
    %44 = vector.load %arg16[%c0_32, %c0_33] : memref<1x128xf32, #tpu.memory_space<vmem>>, vector<1x128xf32>
    %c0_34 = arith.constant 0 : index
    %c0_35 = arith.constant 0 : index
    %45 = vector.load %arg17[%c0_34, %c0_35] : memref<1x128xf32, #tpu.memory_space<vmem>>, vector<1x128xf32>
    %c0_36 = arith.constant 0 : index
    %c0_37 = arith.constant 0 : index
    %46 = vector.load %arg18[%c0_36, %c0_37] : memref<1x128xf32, #tpu.memory_space<vmem>>, vector<1x128xf32>
    %47 = arith.truncf %42 : vector<32x64xf32> to vector<32x64xbf16>
    %cst_38 = arith.constant dense<0.000000e+00> : vector<32x128xf32>
    %48 = tpu.matmul %47, %43, %cst_38 {dimension_numbers = #tpu.dot_dimension_numbers<[1], [0], [0], [1], [0, 0, 1, 1], [], []>} : vector<32x64xbf16>, vector<64x128xbf16>, vector<32x128xf32> -> vector<32x128xf32>
    %49 = vector.broadcast %44 : vector<1x128xf32> to vector<32x128xf32>
    %50 = arith.addf %48, %49 : vector<32x128xf32>
    %cst_39 = arith.constant 0.000000e+00 : f32
    %51 = vector.broadcast %cst_39 : f32 to vector<32x128xf32>
    %52 = arith.maximumf %50, %51 : vector<32x128xf32>
    %53 = vector.broadcast %45 : vector<1x128xf32> to vector<32x128xf32>
    %54 = arith.mulf %52, %53 : vector<32x128xf32>
    %55 = vector.broadcast %46 : vector<1x128xf32> to vector<32x128xf32>
    %56 = arith.addf %54, %55 : vector<32x128xf32>
    %c0_40 = arith.constant 0 : index
    %c0_41 = arith.constant 0 : index
    %57 = vector.load %arg19[%c0_40, %c0_41] : memref<128x1024xbf16, #tpu.memory_space<vmem>>, vector<128x1024xbf16>
    %c0_42 = arith.constant 0 : index
    %c0_43 = arith.constant 0 : index
    %58 = vector.load %arg20[%c0_42, %c0_43] : memref<1x1024xf32, #tpu.memory_space<vmem>>, vector<1x1024xf32>
    %c0_44 = arith.constant 0 : index
    %c0_45 = arith.constant 0 : index
    %59 = vector.load %arg21[%c0_44, %c0_45] : memref<1x1024xf32, #tpu.memory_space<vmem>>, vector<1x1024xf32>
    %c0_46 = arith.constant 0 : index
    %c0_47 = arith.constant 0 : index
    %60 = vector.load %arg22[%c0_46, %c0_47] : memref<1x1024xf32, #tpu.memory_space<vmem>>, vector<1x1024xf32>
    %61 = arith.truncf %56 : vector<32x128xf32> to vector<32x128xbf16>
    %cst_48 = arith.constant dense<0.000000e+00> : vector<32x1024xf32>
    %62 = tpu.matmul %61, %57, %cst_48 {dimension_numbers = #tpu.dot_dimension_numbers<[1], [0], [0], [1], [0, 0, 1, 1], [], []>} : vector<32x128xbf16>, vector<128x1024xbf16>, vector<32x1024xf32> -> vector<32x1024xf32>
    %63 = vector.broadcast %58 : vector<1x1024xf32> to vector<32x1024xf32>
    %64 = arith.addf %62, %63 : vector<32x1024xf32>
    %cst_49 = arith.constant 0.000000e+00 : f32
    %65 = vector.broadcast %cst_49 : f32 to vector<32x1024xf32>
    %66 = arith.maximumf %64, %65 : vector<32x1024xf32>
    %67 = vector.broadcast %59 : vector<1x1024xf32> to vector<32x1024xf32>
    %68 = arith.mulf %66, %67 : vector<32x1024xf32>
    %69 = vector.broadcast %60 : vector<1x1024xf32> to vector<32x1024xf32>
    %70 = arith.addf %68, %69 : vector<32x1024xf32>
    %c0_50 = arith.constant 0 : index
    %c0_51 = arith.constant 0 : index
    %71 = vector.load %arg23[%c0_50, %c0_51] : memref<32x1024xf32, #tpu.memory_space<vmem>>, vector<32x1024xf32>
    tpu.vector_store %arg23[%c0_50, %c0_51], %70 {strides = array<i32>} : memref<32x1024xf32, #tpu.memory_space<vmem>>, vector<32x1024xf32>,
    %c0_i32 = arith.constant 0 : i32
    %72 = arith.cmpi eq, %arg0, %c0_i32 : i32
    %73 = arith.extui %72 : i1 to i32
    %c0_i32_52 = arith.constant 0 : i32
    %74 = arith.cmpi ne, %73, %c0_i32_52 : i32
    scf.if %74 {
      %cst_76 = arith.constant 0xFF800000 : f32
      %144 = vector.broadcast %cst_76 : f32 to vector<8x1024xf32>
      %c0_77 = arith.constant 0 : index
      %c0_78 = arith.constant 0 : index
      %145 = vector.load %arg24[%c0_77, %c0_78] : memref<8x1024xf32, #tpu.memory_space<vmem>>, vector<8x1024xf32>
      tpu.vector_store %arg24[%c0_77, %c0_78], %144 {strides = array<i32>} : memref<8x1024xf32, #tpu.memory_space<vmem>>, vector<8x1024xf32>,
    } else {
    }
    %c0_53 = arith.constant 0 : index
    %c0_54 = arith.constant 0 : index
    %75 = vector.load %arg2[%c0_53, %c0_54] : memref<32x1xi32, #tpu.memory_space<vmem>>, vector<32x1xi32>
    %c0_i32_55 = arith.constant 0 : i32
    %76 = vector.broadcast %c0_i32_55 : i32 to vector<32x1xi32>
    %77 = arith.cmpi eq, %75, %76 : vector<32x1xi32>
    %cst_56 = arith.constant 0xFF800000 : f32
    %78 = vector.shape_cast %77 : vector<32x1xi1> to vector<32x1xi1>
    %79 = vector.broadcast %78 : vector<32x1xi1> to vector<32x1024xi1>
    %80 = vector.broadcast %cst_56 : f32 to vector<32x1024xf32>
    %81 = arith.select %79, %70, %80 : vector<32x1024xi1>, vector<32x1024xf32>
    %cst_57 = arith.constant dense<0xFF800000> : vector<1024xf32>
    %82 = vector.multi_reduction <maximumf>, %81, %cst_57 [0] : vector<32x1024xf32> to vector<1024xf32>
    %83 = vector.shape_cast %82 : vector<1024xf32> to vector<1x1024xf32>
    %c1_i32 = arith.constant 1 : i32
    %84 = vector.broadcast %c1_i32 : i32 to vector<32x1xi32>
    %85 = arith.cmpi eq, %75, %84 : vector<32x1xi32>
    %cst_58 = arith.constant 0xFF800000 : f32
    %86 = vector.shape_cast %85 : vector<32x1xi1> to vector<32x1xi1>
    %87 = vector.broadcast %86 : vector<32x1xi1> to vector<32x1024xi1>
    %88 = vector.broadcast %cst_58 : f32 to vector<32x1024xf32>
    %89 = arith.select %87, %70, %88 : vector<32x1024xi1>, vector<32x1024xf32>
    %cst_59 = arith.constant dense<0xFF800000> : vector<1024xf32>
    %90 = vector.multi_reduction <maximumf>, %89, %cst_59 [0] : vector<32x1024xf32> to vector<1024xf32>
    %91 = vector.shape_cast %90 : vector<1024xf32> to vector<1x1024xf32>
    %c2_i32 = arith.constant 2 : i32
    %92 = vector.broadcast %c2_i32 : i32 to vector<32x1xi32>
    %93 = arith.cmpi eq, %75, %92 : vector<32x1xi32>
    %cst_60 = arith.constant 0xFF800000 : f32
    %94 = vector.shape_cast %93 : vector<32x1xi1> to vector<32x1xi1>
    %95 = vector.broadcast %94 : vector<32x1xi1> to vector<32x1024xi1>
    %96 = vector.broadcast %cst_60 : f32 to vector<32x1024xf32>
    %97 = arith.select %95, %70, %96 : vector<32x1024xi1>, vector<32x1024xf32>
    %cst_61 = arith.constant dense<0xFF800000> : vector<1024xf32>
    %98 = vector.multi_reduction <maximumf>, %97, %cst_61 [0] : vector<32x1024xf32> to vector<1024xf32>
    %99 = vector.shape_cast %98 : vector<1024xf32> to vector<1x1024xf32>
    %c3_i32 = arith.constant 3 : i32
    %100 = vector.broadcast %c3_i32 : i32 to vector<32x1xi32>
    %101 = arith.cmpi eq, %75, %100 : vector<32x1xi32>
    %cst_62 = arith.constant 0xFF800000 : f32
    %102 = vector.shape_cast %101 : vector<32x1xi1> to vector<32x1xi1>
    %103 = vector.broadcast %102 : vector<32x1xi1> to vector<32x1024xi1>
    %104 = vector.broadcast %cst_62 : f32 to vector<32x1024xf32>
    %105 = arith.select %103, %70, %104 : vector<32x1024xi1>, vector<32x1024xf32>
    %cst_63 = arith.constant dense<0xFF800000> : vector<1024xf32>
    %106 = vector.multi_reduction <maximumf>, %105, %cst_63 [0] : vector<32x1024xf32> to vector<1024xf32>
    %107 = vector.shape_cast %106 : vector<1024xf32> to vector<1x1024xf32>
    %c4_i32 = arith.constant 4 : i32
    %108 = vector.broadcast %c4_i32 : i32 to vector<32x1xi32>
    %109 = arith.cmpi eq, %75, %108 : vector<32x1xi32>
    %cst_64 = arith.constant 0xFF800000 : f32
    %110 = vector.shape_cast %109 : vector<32x1xi1> to vector<32x1xi1>
    %111 = vector.broadcast %110 : vector<32x1xi1> to vector<32x1024xi1>
    %112 = vector.broadcast %cst_64 : f32 to vector<32x1024xf32>
    %113 = arith.select %111, %70, %112 : vector<32x1024xi1>, vector<32x1024xf32>
    %cst_65 = arith.constant dense<0xFF800000> : vector<1024xf32>
    %114 = vector.multi_reduction <maximumf>, %113, %cst_65 [0] : vector<32x1024xf32> to vector<1024xf32>
    %115 = vector.shape_cast %114 : vector<1024xf32> to vector<1x1024xf32>
    %c5_i32 = arith.constant 5 : i32
    %116 = vector.broadcast %c5_i32 : i32 to vector<32x1xi32>
    %117 = arith.cmpi eq, %75, %116 : vector<32x1xi32>
    %cst_66 = arith.constant 0xFF800000 : f32
    %118 = vector.shape_cast %117 : vector<32x1xi1> to vector<32x1xi1>
    %119 = vector.broadcast %118 : vector<32x1xi1> to vector<32x1024xi1>
    %120 = vector.broadcast %cst_66 : f32 to vector<32x1024xf32>
    %121 = arith.select %119, %70, %120 : vector<32x1024xi1>, vector<32x1024xf32>
    %cst_67 = arith.constant dense<0xFF800000> : vector<1024xf32>
    %122 = vector.multi_reduction <maximumf>, %121, %cst_67 [0] : vector<32x1024xf32> to vector<1024xf32>
    %123 = vector.shape_cast %122 : vector<1024xf32> to vector<1x1024xf32>
    %c6_i32 = arith.constant 6 : i32
    %124 = vector.broadcast %c6_i32 : i32 to vector<32x1xi32>
    %125 = arith.cmpi eq, %75, %124 : vector<32x1xi32>
    %cst_68 = arith.constant 0xFF800000 : f32
    %126 = vector.shape_cast %125 : vector<32x1xi1> to vector<32x1xi1>
    %127 = vector.broadcast %126 : vector<32x1xi1> to vector<32x1024xi1>
    %128 = vector.broadcast %cst_68 : f32 to vector<32x1024xf32>
    %129 = arith.select %127, %70, %128 : vector<32x1024xi1>, vector<32x1024xf32>
    %cst_69 = arith.constant dense<0xFF800000> : vector<1024xf32>
    %130 = vector.multi_reduction <maximumf>, %129, %cst_69 [0] : vector<32x1024xf32> to vector<1024xf32>
    %131 = vector.shape_cast %130 : vector<1024xf32> to vector<1x1024xf32>
    %c7_i32 = arith.constant 7 : i32
    %132 = vector.broadcast %c7_i32 : i32 to vector<32x1xi32>
    %133 = arith.cmpi eq, %75, %132 : vector<32x1xi32>
    %cst_70 = arith.constant 0xFF800000 : f32
    %134 = vector.shape_cast %133 : vector<32x1xi1> to vector<32x1xi1>
    %135 = vector.broadcast %134 : vector<32x1xi1> to vector<32x1024xi1>
    %136 = vector.broadcast %cst_70 : f32 to vector<32x1024xf32>
    %137 = arith.select %135, %70, %136 : vector<32x1024xi1>, vector<32x1024xf32>
    %cst_71 = arith.constant dense<0xFF800000> : vector<1024xf32>
    %138 = vector.multi_reduction <maximumf>, %137, %cst_71 [0] : vector<32x1024xf32> to vector<1024xf32>
    %139 = vector.shape_cast %138 : vector<1024xf32> to vector<1x1024xf32>
    %140 = tpu.concatenate %83, %91, %99, %107, %115, %123, %131, %139 in 0 : vector<1x1024xf32>, vector<1x1024xf32>, vector<1x1024xf32>, vector<1x1024xf32>, vector<1x1024xf32>, vector<1x1024xf32>, vector<1x1024xf32>, vector<1x1024xf32> -> vector<8x1024xf32>
    %c0_72 = arith.constant 0 : index
    %c0_73 = arith.constant 0 : index
    %141 = vector.load %arg24[%c0_72, %c0_73] : memref<8x1024xf32, #tpu.memory_space<vmem>>, vector<8x1024xf32>
    %142 = arith.maximumf %141, %140 : vector<8x1024xf32>
    %c0_74 = arith.constant 0 : index
    %c0_75 = arith.constant 0 : index
    %143 = vector.load %arg24[%c0_74, %c0_75] : memref<8x1024xf32, #tpu.memory_space<vmem>>, vector<8x1024xf32>
    tpu.vector_store %arg24[%c0_74, %c0_75], %142 {strides = array<i32>} : memref<8x1024xf32, #tpu.memory_space<vmem>>, vector<8x1024xf32>,
    return
  }
  func.func @transform_0(%arg0: i32) -> (i32, i32) {
    %c0_i32 = arith.constant 0 : i32
    %c0_i32_0 = arith.constant 0 : i32
    return %arg0, %c0_i32 : i32, i32
  }
  func.func @transform_1(%arg0: i32) -> (i32, i32) {
    %c0_i32 = arith.constant 0 : i32
    %c0_i32_0 = arith.constant 0 : i32
    return %arg0, %c0_i32 : i32, i32
  }
  func.func @transform_2(%arg0: i32) -> (i32, i32) {
    %c0_i32 = arith.constant 0 : i32
    %c0_i32_0 = arith.constant 0 : i32
    %c0_i32_1 = arith.constant 0 : i32
    return %c0_i32, %c0_i32_0 : i32, i32
  }
  func.func @transform_3(%arg0: i32) -> (i32, i32) {
    %c0_i32 = arith.constant 0 : i32
    %c0_i32_0 = arith.constant 0 : i32
    %c0_i32_1 = arith.constant 0 : i32
    return %c0_i32, %c0_i32_0 : i32, i32
  }
  func.func @transform_4(%arg0: i32) -> (i32, i32) {
    %c0_i32 = arith.constant 0 : i32
    %c0_i32_0 = arith.constant 0 : i32
    %c0_i32_1 = arith.constant 0 : i32
    return %c0_i32, %c0_i32_0 : i32, i32
  }
  func.func @transform_5(%arg0: i32) -> (i32, i32) {
    %c0_i32 = arith.constant 0 : i32
    %c0_i32_0 = arith.constant 0 : i32
    %c0_i32_1 = arith.constant 0 : i32
    return %c0_i32, %c0_i32_0 : i32, i32
  }
  func.func @transform_6(%arg0: i32) -> (i32, i32) {
    %c0_i32 = arith.constant 0 : i32
    %c0_i32_0 = arith.constant 0 : i32
    %c0_i32_1 = arith.constant 0 : i32
    return %c0_i32, %c0_i32_0 : i32, i32
  }
  func.func @transform_7(%arg0: i32) -> (i32, i32) {
    %c0_i32 = arith.constant 0 : i32
    %c0_i32_0 = arith.constant 0 : i32
    %c0_i32_1 = arith.constant 0 : i32
    return %c0_i32, %c0_i32_0 : i32, i32
  }
  func.func @transform_8(%arg0: i32) -> (i32, i32) {
    %c0_i32 = arith.constant 0 : i32
    %c0_i32_0 = arith.constant 0 : i32
    %c0_i32_1 = arith.constant 0 : i32
    return %c0_i32, %c0_i32_0 : i32, i32
  }
  func.func @transform_9(%arg0: i32) -> (i32, i32) {
    %c0_i32 = arith.constant 0 : i32
    %c0_i32_0 = arith.constant 0 : i32
    %c0_i32_1 = arith.constant 0 : i32
    return %c0_i32, %c0_i32_0 : i32, i32
  }
  func.func @transform_10(%arg0: i32) -> (i32, i32) {
    %c0_i32 = arith.constant 0 : i32
    %c0_i32_0 = arith.constant 0 : i32
    %c0_i32_1 = arith.constant 0 : i32
    return %c0_i32, %c0_i32_0 : i32, i32
  }
  func.func @transform_11(%arg0: i32) -> (i32, i32) {
    %c0_i32 = arith.constant 0 : i32
    %c0_i32_0 = arith.constant 0 : i32
    %c0_i32_1 = arith.constant 0 : i32
    return %c0_i32, %c0_i32_0 : i32, i32
  }
  func.func @transform_12(%arg0: i32) -> (i32, i32) {
    %c0_i32 = arith.constant 0 : i32
    %c0_i32_0 = arith.constant 0 : i32
    %c0_i32_1 = arith.constant 0 : i32
    return %c0_i32, %c0_i32_0 : i32, i32
  }
  func.func @transform_13(%arg0: i32) -> (i32, i32) {
    %c0_i32 = arith.constant 0 : i32
    %c0_i32_0 = arith.constant 0 : i32
    %c0_i32_1 = arith.constant 0 : i32
    return %c0_i32, %c0_i32_0 : i32, i32
  }
  func.func @transform_14(%arg0: i32) -> (i32, i32) {
    %c0_i32 = arith.constant 0 : i32
    %c0_i32_0 = arith.constant 0 : i32
    %c0_i32_1 = arith.constant 0 : i32
    return %c0_i32, %c0_i32_0 : i32, i32
  }
  func.func @transform_15(%arg0: i32) -> (i32, i32) {
    %c0_i32 = arith.constant 0 : i32
    %c0_i32_0 = arith.constant 0 : i32
    %c0_i32_1 = arith.constant 0 : i32
    return %c0_i32, %c0_i32_0 : i32, i32
  }
  func.func @transform_16(%arg0: i32) -> (i32, i32) {
    %c0_i32 = arith.constant 0 : i32
    %c0_i32_0 = arith.constant 0 : i32
    %c0_i32_1 = arith.constant 0 : i32
    return %c0_i32, %c0_i32_0 : i32, i32
  }
  func.func @transform_17(%arg0: i32) -> (i32, i32) {
    %c0_i32 = arith.constant 0 : i32
    %c0_i32_0 = arith.constant 0 : i32
    %c0_i32_1 = arith.constant 0 : i32
    return %c0_i32, %c0_i32_0 : i32, i32
  }
  func.func @transform_18(%arg0: i32) -> (i32, i32) {
    %c0_i32 = arith.constant 0 : i32
    %c0_i32_0 = arith.constant 0 : i32
    %c0_i32_1 = arith.constant 0 : i32
    return %c0_i32, %c0_i32_0 : i32, i32
  }
  func.func @transform_19(%arg0: i32) -> (i32, i32) {
    %c0_i32 = arith.constant 0 : i32
    %c0_i32_0 = arith.constant 0 : i32
    %c0_i32_1 = arith.constant 0 : i32
    return %c0_i32, %c0_i32_0 : i32, i32
  }
  func.func @transform_20(%arg0: i32) -> (i32, i32) {
    %c0_i32 = arith.constant 0 : i32
    %c0_i32_0 = arith.constant 0 : i32
    %c0_i32_1 = arith.constant 0 : i32
    return %c0_i32, %c0_i32_0 : i32, i32
  }
  func.func @transform_21(%arg0: i32) -> (i32, i32) {
    %c0_i32 = arith.constant 0 : i32
    %c0_i32_0 = arith.constant 0 : i32
    %c0_i32_1 = arith.constant 0 : i32
    return %c0_i32, %c0_i32_0 : i32, i32
  }
  func.func @transform_22(%arg0: i32) -> (i32, i32) {
    %c0_i32 = arith.constant 0 : i32
    %c0_i32_0 = arith.constant 0 : i32
    return %arg0, %c0_i32 : i32, i32
  }
  func.func @transform_23(%arg0: i32) -> (i32, i32) {
    %c0_i32 = arith.constant 0 : i32
    %c0_i32_0 = arith.constant 0 : i32
    %c0_i32_1 = arith.constant 0 : i32
    return %c0_i32, %c0_i32_0 : i32, i32
  }
}

</mosaic_0001>

<llo_original>
// kernel: tpu_custom_call.1
$region0: #{tpu_custom_call.1}
  #allocation0 [shape = 'u32[]', space=smem, size = 0x4, offset = 0x4, fixed_abs, tag = 'smem constant byte address 0x4 - core index']
  #allocation1 [shape = 'u32[144,128]{1,0:T(1,128)}', space=vmem, size = 0x12000, scoped, tag = 'internal scratch']
  %s0 = inlined_call_operand.vmem [shape: f32[32,3], index: 0, kind: input, shape index: {}]
  %s1 = inlined_call_operand.vmem [shape: s32[32,1], index: 1, kind: input, shape index: {}]
  %s2 = inlined_call_operand.vmem [shape: bf16[3,64], index: 2, kind: input, shape index: {}]
  %s3 = inlined_call_operand.hbm [shape: f32[1,64], index: 3, kind: input, shape index: {}]
  %s4 = inlined_call_operand.hbm [shape: f32[1,64], index: 4, kind: input, shape index: {}]
  %s5 = inlined_call_operand.hbm [shape: f32[1,64], index: 5, kind: input, shape index: {}]
  %s6 = inlined_call_operand.vmem [shape: bf16[64,64], index: 6, kind: input, shape index: {}]
  %s7 = inlined_call_operand.hbm [shape: f32[1,64], index: 7, kind: input, shape index: {}]
  %s8 = inlined_call_operand.hbm [shape: f32[1,64], index: 8, kind: input, shape index: {}]
  %s9 = inlined_call_operand.hbm [shape: f32[1,64], index: 9, kind: input, shape index: {}]
  %s10 = inlined_call_operand.vmem [shape: bf16[64,64], index: 10, kind: input, shape index: {}]
  %s11 = inlined_call_operand.hbm [shape: f32[1,64], index: 11, kind: input, shape index: {}]
  %s12 = inlined_call_operand.hbm [shape: f32[1,64], index: 12, kind: input, shape index: {}]
  %s13 = inlined_call_operand.hbm [shape: f32[1,64], index: 13, kind: input, shape index: {}]
  %s14 = inlined_call_operand.vmem [shape: bf16[64,128], index: 14, kind: input, shape index: {}]
  %s15 = inlined_call_operand.vmem [shape: f32[1,128], index: 15, kind: input, shape index: {}]
  %s16 = inlined_call_operand.vmem [shape: f32[1,128], index: 16, kind: input, shape index: {}]
  %s17 = inlined_call_operand.vmem [shape: f32[1,128], index: 17, kind: input, shape index: {}]
  %s18 = inlined_call_operand.hbm [shape: bf16[128,1024], index: 18, kind: input, shape index: {}]
  %s19 = inlined_call_operand.vmem [shape: f32[1,1024], index: 19, kind: input, shape index: {}]
  %s20 = inlined_call_operand.vmem [shape: f32[1,1024], index: 20, kind: input, shape index: {}]
  %s21 = inlined_call_operand.vmem [shape: f32[1,1024], index: 21, kind: input, shape index: {}]
  %s22 = inlined_call_operand.hbm [shape: f32[32,1024], index: 22, kind: output, shape index: {0}]
  %s23 = inlined_call_operand.hbm [shape: f32[8,1024], index: 23, kind: output, shape index: {1}]
  %24 = xla_tuple %s22, %s23
  %s25 = sld [smem:[#allocation0]]
  $region150: #{tpu_custom_call.1} parent=0
    _
  %s27 = ssub.s32 1, %s25
  %s28 = scalar_select 0, %s27, %s25
  $region1: #{tpu_custom_call.1} parent=0
    #allocation2 [shape = 'u8[512]{0}', space=vmem, size = 0x400, scoped, tag = 'input window, operand 3, single buffered']
    #allocation3 [shape = 's32[1]{0}', space=sflag, size = 0x4, scoped, tag = 'scoped memory for tpu_custom_call.1']
    #allocation4 [shape = 's32[1]{0}', space=sflag, size = 0x4, scoped, tag = 'scoped memory for tpu_custom_call.1']
    #allocation5 [shape = 'u8[512]{0}', space=vmem, size = 0x400, scoped, tag = 'input window, operand 4, single buffered']
    #allocation6 [shape = 's32[1]{0}', space=sflag, size = 0x4, scoped, tag = 'scoped memory for tpu_custom_call.1']
    #allocation7 [shape = 'u8[512]{0}', space=vmem, size = 0x400, scoped, tag = 'input window, operand 5, single buffered']
    #allocation8 [shape = 'u8[512]{0}', space=vmem, size = 0x400, scoped, tag = 'input window, operand 7, single buffered']
    #allocation9 [shape = 's32[1]{0}', space=sflag, size = 0x4, scoped, tag = 'scoped memory for tpu_custom_call.1']
    #allocation10 [shape = 'u8[512]{0}', space=vmem, size = 0x400, scoped, tag = 'input window, operand 8, single buffered']
    #allocation11 [shape = 'u8[512]{0}', space=vmem, size = 0x400, scoped, tag = 'input window, operand 9, single buffered']
    #allocation12 [shape = 's32[1]{0}', space=sflag, size = 0x4, scoped, tag = 'scoped memory for tpu_custom_call.1']
    #allocation13 [shape = 'u8[512]{0}', space=vmem, size = 0x400, scoped, tag = 'input window, operand 11, single buffered']
    #allocation14 [shape = 'u8[512]{0}', space=vmem, size = 0x400, scoped, tag = 'input window, operand 12, single buffered']
    #allocation15 [shape = 's32[1]{0}', space=sflag, size = 0x4, scoped, tag = 'scoped memory for tpu_custom_call.1']
    #allocation16 [shape = 'u8[512]{0}', space=vmem, size = 0x400, scoped, tag = 'input window, operand 13, single buffered']
    #allocation17 [shape = 'u8[262144]{0}', space=vmem, size = 0x40000, scoped, tag = 'input window, operand 18, single buffered']
    #allocation18 [shape = 's32[1]{0}', space=sflag, size = 0x4, scoped, tag = 'scoped memory for tpu_custom_call.1']
    #allocation19 [shape = 'u8[131072]{0}', space=vmem, size = 0x20000, scoped, tag = 'output window, operand 0, single buffered']
    #allocation20 [shape = 'u8[32768]{0}', space=vmem, size = 0x8000, scoped, tag = 'output window, operand 1, single buffered']
    #allocation21 [shape = 's32[1]{0}', space=sflag, size = 0x4, scoped, tag = 'scoped memory for tpu_custom_call.1']
    %29 = vsyncpa [#allocation3], 0
    %30 = vsyncpa [#allocation6], 0
    %31 = vsyncpa [#allocation9], 0
    %32 = vsyncpa [#allocation12], 0
    %33 = vsyncpa [#allocation15], 0
    %34 = vsyncpa [#allocation18], 0
    %35 = vsyncpa [#allocation4], 0
    %36 = vsyncpa [#allocation21], 0
    // Predicated region
    $region2: #{tpu_custom_call.1} parent=1 // pred_check
      _
    $region3: #{tpu_custom_call.1} parent=1 // pred_check_branch
      %38 = sbr.rel (0) target = $region5
    $region4: #{tpu_custom_call.1} parent=1 // pred_region
      _
    $region5: #{tpu_custom_call.1} parent=1 // pred_fallthru
      _
    // Predicated region
    $region6: #{tpu_custom_call.1} parent=1 // pred_check
      _
    $region7: #{tpu_custom_call.1} parent=1 // pred_check_branch
      %40 = sbr.rel (0) target = $region9
    $region8: #{tpu_custom_call.1} parent=1 // pred_region
      _
    $region9: #{tpu_custom_call.1} parent=1 // pred_fallthru
      _
    // Predicated region
    $region10: #{tpu_custom_call.1} parent=1 // pred_check
      _
    $region11: #{tpu_custom_call.1} parent=1 // pred_check_branch
      %42 = sbr.rel (0) target = $region13
    $region12: #{tpu_custom_call.1} parent=1 // pred_region
      _
    $region13: #{tpu_custom_call.1} parent=1 // pred_fallthru
      _
    // Predicated region
    $region14: #{tpu_custom_call.1} parent=1 // pred_check
      _
    $region15: #{tpu_custom_call.1} parent=1 // pred_check_branch
      %44 = sbr.rel (0) target = $region17
    $region16: #{tpu_custom_call.1} parent=1 // pred_region
      %s46 = ssub.s32 16, 16
      %47 = vsyncadd [#allocation3], %s46
      %s49 = sshll.u32 [#allocation2], 4
      %s50 = int_to_ptr.vmem [resolvable:$true] %s49
      %52 = dma.hbm_to_vmem [thread:$0]  %s3, 16, %s50, [#allocation3]
    $region17: #{tpu_custom_call.1} parent=1 // pred_fallthru
      _
    // Predicated region
    $region18: #{tpu_custom_call.1} parent=1 // pred_check
      _
    $region19: #{tpu_custom_call.1} parent=1 // pred_check_branch
      %54 = sbr.rel (0) target = $region21
    $region20: #{tpu_custom_call.1} parent=1 // pred_region
      %s56 = ssub.s32 16, 16
      %57 = vsyncadd [#allocation6], %s56
      %s59 = sshll.u32 [#allocation5], 4
      %s60 = int_to_ptr.vmem [resolvable:$true] %s59
      %62 = dma.hbm_to_vmem [thread:$0]  %s4, 16, %s60, [#allocation6]
    $region21: #{tpu_custom_call.1} parent=1 // pred_fallthru
      _
    // Predicated region
    $region22: #{tpu_custom_call.1} parent=1 // pred_check
      _
    $region23: #{tpu_custom_call.1} parent=1 // pred_check_branch
      %64 = sbr.rel (0) target = $region25
    $region24: #{tpu_custom_call.1} parent=1 // pred_region
      %s66 = ssub.s32 16, 16
      %67 = vsyncadd [#allocation6], %s66
      %s69 = sshll.u32 [#allocation7], 4
      %s70 = int_to_ptr.vmem [resolvable:$true] %s69
      %72 = dma.hbm_to_vmem [thread:$0]  %s5, 16, %s70, [#allocation6]
    $region25: #{tpu_custom_call.1} parent=1 // pred_fallthru
      _
    // Predicated region
    $region26: #{tpu_custom_call.1} parent=1 // pred_check
      _
    $region27: #{tpu_custom_call.1} parent=1 // pred_check_branch
      %74 = sbr.rel (0) target = $region29
    $region28: #{tpu_custom_call.1} parent=1 // pred_region
      _
    $region29: #{tpu_custom_call.1} parent=1 // pred_fallthru
      _
    // Predicated region
    $region30: #{tpu_custom_call.1} parent=1 // pred_check
      _
    $region31: #{tpu_custom_call.1} parent=1 // pred_check_branch
      %76 = sbr.rel (0) target = $region33
    $region32: #{tpu_custom_call.1} parent=1 // pred_region
      %s78 = ssub.s32 16, 16
      %79 = vsyncadd [#allocation9], %s78
      %s81 = sshll.u32 [#allocation8], 4
      %s82 = int_to_ptr.vmem [resolvable:$true] %s81
      %84 = dma.hbm_to_vmem [thread:$0]  %s7, 16, %s82, [#allocation9]
    $region33: #{tpu_custom_call.1} parent=1 // pred_fallthru
      _
    // Predicated region
    $region34: #{tpu_custom_call.1} parent=1 // pred_check
      _
    $region35: #{tpu_custom_call.1} parent=1 // pred_check_branch
      %86 = sbr.rel (0) target = $region37
    $region36: #{tpu_custom_call.1} parent=1 // pred_region
      %s88 = ssub.s32 16, 16
      %89 = vsyncadd [#allocation9], %s88
      %s91 = sshll.u32 [#allocation10], 4
      %s92 = int_to_ptr.vmem [resolvable:$true] %s91
      %94 = dma.hbm_to_vmem [thread:$0]  %s8, 16, %s92, [#allocation9]
    $region37: #{tpu_custom_call.1} parent=1 // pred_fallthru
      _
    // Predicated region
    $region38: #{tpu_custom_call.1} parent=1 // pred_check
      _
    $region39: #{tpu_custom_call.1} parent=1 // pred_check_branch
      %96 = sbr.rel (0) target = $region41
    $region40: #{tpu_custom_call.1} parent=1 // pred_region
      %s98 = ssub.s32 16, 16
      %99 = vsyncadd [#allocation12], %s98
      %s101 = sshll.u32 [#allocation11], 4
      %s102 = int_to_ptr.vmem [resolvable:$true] %s101
      %104 = dma.hbm_to_vmem [thread:$0]  %s9, 16, %s102, [#allocation12]
    $region41: #{tpu_custom_call.1} parent=1 // pred_fallthru
      _
    // Predicated region
    $region42: #{tpu_custom_call.1} parent=1 // pred_check
      _
    $region43: #{tpu_custom_call.1} parent=1 // pred_check_branch
      %106 = sbr.rel (0) target = $region45
    $region44: #{tpu_custom_call.1} parent=1 // pred_region
      _
    $region45: #{tpu_custom_call.1} parent=1 // pred_fallthru
      _
    // Predicated region
    $region46: #{tpu_custom_call.1} parent=1 // pred_check
      _
    $region47: #{tpu_custom_call.1} parent=1 // pred_check_branch
      %108 = sbr.rel (0) target = $region49
    $region48: #{tpu_custom_call.1} parent=1 // pred_region
      %s110 = ssub.s32 16, 16
      %111 = vsyncadd [#allocation12], %s110
      %s113 = sshll.u32 [#allocation13], 4
      %s114 = int_to_ptr.vmem [resolvable:$true] %s113
      %116 = dma.hbm_to_vmem [thread:$0]  %s11, 16, %s114, [#allocation12]
    $region49: #{tpu_custom_call.1} parent=1 // pred_fallthru
      _
    // Predicated region
    $region50: #{tpu_custom_call.1} parent=1 // pred_check
      _
    $region51: #{tpu_custom_call.1} parent=1 // pred_check_branch
      %118 = sbr.rel (0) target = $region53
    $region52: #{tpu_custom_call.1} parent=1 // pred_region
      %s120 = ssub.s32 16, 16
      %121 = vsyncadd [#allocation15], %s120
      %s123 = sshll.u32 [#allocation14], 4
      %s124 = int_to_ptr.vmem [resolvable:$true] %s123
      %126 = dma.hbm_to_vmem [thread:$0]  %s12, 16, %s124, [#allocation15]
    $region53: #{tpu_custom_call.1} parent=1 // pred_fallthru
      _
    // Predicated region
    $region54: #{tpu_custom_call.1} parent=1 // pred_check
      _
    $region55: #{tpu_custom_call.1} parent=1 // pred_check_branch
      %128 = sbr.rel (0) target = $region57
    $region56: #{tpu_custom_call.1} parent=1 // pred_region
      %s130 = ssub.s32 16, 16
      %131 = vsyncadd [#allocation15], %s130
      %s133 = sshll.u32 [#allocation16], 4
      %s134 = int_to_ptr.vmem [resolvable:$true] %s133
      %136 = dma.hbm_to_vmem [thread:$0]  %s13, 16, %s134, [#allocation15]
    $region57: #{tpu_custom_call.1} parent=1 // pred_fallthru
      _
    // Predicated region
    $region58: #{tpu_custom_call.1} parent=1 // pred_check
      _
    $region59: #{tpu_custom_call.1} parent=1 // pred_check_branch
      %138 = sbr.rel (0) target = $region61
    $region60: #{tpu_custom_call.1} parent=1 // pred_region
      _
    $region61: #{tpu_custom_call.1} parent=1 // pred_fallthru
      _
    // Predicated region
    $region62: #{tpu_custom_call.1} parent=1 // pred_check
      _
    $region63: #{tpu_custom_call.1} parent=1 // pred_check_branch
      %140 = sbr.rel (0) target = $region65
    $region64: #{tpu_custom_call.1} parent=1 // pred_region
      _
    $region65: #{tpu_custom_call.1} parent=1 // pred_fallthru
      _
    // Predicated region
    $region66: #{tpu_custom_call.1} parent=1 // pred_check
      _
    $region67: #{tpu_custom_call.1} parent=1 // pred_check_branch
      %142 = sbr.rel (0) target = $region69
    $region68: #{tpu_custom_call.1} parent=1 // pred_region
      _
    $region69: #{tpu_custom_call.1} parent=1 // pred_fallthru
      _
    // Predicated region
    $region70: #{tpu_custom_call.1} parent=1 // pred_check
      _
    $region71: #{tpu_custom_call.1} parent=1 // pred_check_branch
      %144 = sbr.rel (0) target = $region73
    $region72: #{tpu_custom_call.1} parent=1 // pred_region
      _
    $region73: #{tpu_custom_call.1} parent=1 // pred_fallthru
      _
    // Predicated region
    $region74: #{tpu_custom_call.1} parent=1 // pred_check
      _
    $region75: #{tpu_custom_call.1} parent=1 // pred_check_branch
      %146 = sbr.rel (0) target = $region77
    $region76: #{tpu_custom_call.1} parent=1 // pred_region
      %s148 = ssub.s32 8192, 8192
      %149 = vsyncadd [#allocation18], %s148
      %s150 = sshll.u32 [#allocation17], 4
      %s151 = int_to_ptr.vmem [resolvable:$true] %s150
      %156 = dma.hbm_to_vmem [thread:$0]  %s18, 8192, %s151, [#allocation18], 512, 512, 32
    $region77: #{tpu_custom_call.1} parent=1 // pred_fallthru
      _
    // Predicated region
    $region78: #{tpu_custom_call.1} parent=1 // pred_check
      _
    $region79: #{tpu_custom_call.1} parent=1 // pred_check_branch
      %158 = sbr.rel (0) target = $region81
    $region80: #{tpu_custom_call.1} parent=1 // pred_region
      _
    $region81: #{tpu_custom_call.1} parent=1 // pred_fallthru
      _
    // Predicated region
    $region82: #{tpu_custom_call.1} parent=1 // pred_check
      _
    $region83: #{tpu_custom_call.1} parent=1 // pred_check_branch
      %160 = sbr.rel (0) target = $region85
    $region84: #{tpu_custom_call.1} parent=1 // pred_region
      _
    $region85: #{tpu_custom_call.1} parent=1 // pred_fallthru
      _
    // Predicated region
    $region86: #{tpu_custom_call.1} parent=1 // pred_check
      _
    $region87: #{tpu_custom_call.1} parent=1 // pred_check_branch
      %162 = sbr.rel (0) target = $region89
    $region88: #{tpu_custom_call.1} parent=1 // pred_region
      _
    $region89: #{tpu_custom_call.1} parent=1 // pred_fallthru
      _
    // Predicated region
    $region90: #{tpu_custom_call.1} parent=1 // pred_check
      _
    $region91: #{tpu_custom_call.1} parent=1 // pred_check_branch
      %164 = sbr.rel (0) target = $region93
    $region92: #{tpu_custom_call.1} parent=1 // pred_region
      %165 = dma.done [#allocation3], 16
    $region93: #{tpu_custom_call.1} parent=1 // pred_fallthru
      _
    // Predicated region
    $region94: #{tpu_custom_call.1} parent=1 // pred_check
      _
    $region95: #{tpu_custom_call.1} parent=1 // pred_check_branch
      %167 = sbr.rel (0) target = $region97
    $region96: #{tpu_custom_call.1} parent=1 // pred_region
      %168 = dma.done [#allocation6], 16
    $region97: #{tpu_custom_call.1} parent=1 // pred_fallthru
      _
    // Predicated region
    $region98: #{tpu_custom_call.1} parent=1 // pred_check
      _
    $region99: #{tpu_custom_call.1} parent=1 // pred_check_branch
      %170 = sbr.rel (0) target = $region101
    $region100: #{tpu_custom_call.1} parent=1 // pred_region
      %171 = dma.done [#allocation6], 16
    $region101: #{tpu_custom_call.1} parent=1 // pred_fallthru
      _
    // Predicated region
    $region102: #{tpu_custom_call.1} parent=1 // pred_check
      _
    $region103: #{tpu_custom_call.1} parent=1 // pred_check_branch
      %173 = sbr.rel (0) target = $region105
    $region104: #{tpu_custom_call.1} parent=1 // pred_region
      %174 = dma.done [#allocation9], 16
    $region105: #{tpu_custom_call.1} parent=1 // pred_fallthru
      _
    // Predicated region
    $region106: #{tpu_custom_call.1} parent=1 // pred_check
      _
    $region107: #{tpu_custom_call.1} parent=1 // pred_check_branch
      %176 = sbr.rel (0) target = $region109
    $region108: #{tpu_custom_call.1} parent=1 // pred_region
      %177 = dma.done [#allocation9], 16
    $region109: #{tpu_custom_call.1} parent=1 // pred_fallthru
      _
    // Predicated region
    $region110: #{tpu_custom_call.1} parent=1 // pred_check
      _
    $region111: #{tpu_custom_call.1} parent=1 // pred_check_branch
      %179 = sbr.rel (0) target = $region113
    $region112: #{tpu_custom_call.1} parent=1 // pred_region
      %180 = dma.done [#allocation12], 16
    $region113: #{tpu_custom_call.1} parent=1 // pred_fallthru
      _
    // Predicated region
    $region114: #{tpu_custom_call.1} parent=1 // pred_check
      _
    $region115: #{tpu_custom_call.1} parent=1 // pred_check_branch
      %182 = sbr.rel (0) target = $region117
    $region116: #{tpu_custom_call.1} parent=1 // pred_region
      %183 = dma.done [#allocation12], 16
    $region117: #{tpu_custom_call.1} parent=1 // pred_fallthru
      _
    // Predicated region
    $region118: #{tpu_custom_call.1} parent=1 // pred_check
      _
    $region119: #{tpu_custom_call.1} parent=1 // pred_check_branch
      %185 = sbr.rel (0) target = $region121
    $region120: #{tpu_custom_call.1} parent=1 // pred_region
      %186 = dma.done [#allocation15], 16
    $region121: #{tpu_custom_call.1} parent=1 // pred_fallthru
      _
    // Predicated region
    $region122: #{tpu_custom_call.1} parent=1 // pred_check
      _
    $region123: #{tpu_custom_call.1} parent=1 // pred_check_branch
      %188 = sbr.rel (0) target = $region125
    $region124: #{tpu_custom_call.1} parent=1 // pred_region
      %189 = dma.done [#allocation15], 16
    $region125: #{tpu_custom_call.1} parent=1 // pred_fallthru
      _
    // Predicated region
    $region126: #{tpu_custom_call.1} parent=1 // pred_check
      _
    $region127: #{tpu_custom_call.1} parent=1 // pred_check_branch
      %191 = sbr.rel (0) target = $region129
    $region128: #{tpu_custom_call.1} parent=1 // pred_region
      %192 = dma.done [#allocation18], 8192
    $region129: #{tpu_custom_call.1} parent=1 // pred_fallthru
      _
    %v194 = vld [vmem:[%s0] sm:$0xff]
    %v195 = vld [vmem:[%s0 + $0x8] sm:$0xff]
    %v196 = vld [vmem:[%s0 + $0x10] sm:$0xff]
    %v197 = vld [vmem:[%s0 + $0x18] sm:$0xff]
    %v198 = vld [vmem:[%s2] sm:$0x3]
    %v199 = vld [vmem:[#allocation2] sm:$0x1]
    %v200 = vld [vmem:[#allocation5] sm:$0x1]
    %v201 = vld [vmem:[#allocation7] sm:$0x1]
    %v202 = vpack.c.bf16 %v195, %v194
    %v203 = vpack.c.bf16 %v197, %v196
    %v205 = vlaneseq
    %v206 = vshrl.u32 %v205, 7
    %v207 = vsub.s32 0, %v206
    %v208 = vrot.slane %v199, %v207
    %vm210 = vcmask 23552
    %v212 = vsel %vm210, %v202, 0
    %v215 = vsel %vm210, %v203, 0
    %vm217 = vcmask 1040384
    %vm218 = vcmask 1041408
    %v219 = vsel %vm217, 4294967295, 65535
    %v220 = vsel %vm218, %v219, 0
    %v222 = vand.u32 %v198, %v220
    %224 = vmatprep.subr.bf16.mxu0 0
    %225 = vmatpush1.bf16.msra.mxu0 %v222
    %226 = vmatprep.subr.bf16.mxu0 0
    %227 = vmatpush1.bf16.msra.mxu0 0
    %228 = vmatprep.subr.bf16.mxu0 0
    %229 = vmatpush1.bf16.msra.mxu0 0
    %230 = vmatprep.subr.bf16.mxu0 0
    %231 = vmatpush1.bf16.msra.mxu0 0
    %232 = vmatprep.subr.bf16.mxu0 0
    %233 = vmatpush1.bf16.msra.mxu0 0
    %234 = vmatprep.subr.bf16.mxu0 0
    %235 = vmatpush1.bf16.msra.mxu0 0
    %236 = vmatprep.subr.bf16.mxu0 0
    %237 = vmatpush1.bf16.msra.mxu0 0
    %238 = vmatprep.subr.bf16.mxu0 0
    %239 = vmatpush1.bf16.msra.mxu0 0
    %240 = vmatprep.subr.bf16.mxu0 0
    %241 = vmatpush1.bf16.msra.mxu0 0
    %242 = vmatprep.subr.bf16.mxu0 0
    %243 = vmatpush1.bf16.msra.mxu0 0
    %244 = vmatprep.subr.bf16.mxu0 0
    %245 = vmatpush1.bf16.msra.mxu0 0
    %246 = vmatprep.subr.bf16.mxu0 0
    %247 = vmatpush1.bf16.msra.mxu0 0
    %248 = vmatprep.subr.bf16.mxu0 0
    %249 = vmatpush1.bf16.msra.mxu0 0
    %250 = vmatprep.subr.bf16.mxu0 0
    %251 = vmatpush1.bf16.msra.mxu0 0
    %252 = vmatprep.subr.bf16.mxu0 0
    %253 = vmatpush1.bf16.msra.mxu0 0
    %254 = vmatprep.subr.bf16.mxu0 0
    %255 = vmatpush1.bf16.msra.mxu0 0
    %256 = vmatprep.mubr.bf16.mxu0 0
    %257 = vmatmul.mubr.bf16.gmra.mrb[0].mxu0 %v212
    %v258 = vpop.f32.mrb[0].mxu0
    %v259 = vadd.f32 %v208, %v258
    %v260 = vpop.f32.mrb[0].mxu0
    %v261 = vpop.f32.mrb[0].mxu0
    %v262 = vadd.f32 %v208, %v261
    %v263 = vpop.f32.mrb[0].mxu0
    %264 = vmatprep.mubr.bf16.mxu0 0
    %265 = vmatmul.mubr.bf16.gmra.mrb[0].mxu0 %v215
    %v266 = vpop.f32.mrb[0].mxu0
    %v267 = vadd.f32 %v208, %v266
    %v268 = vpop.f32.mrb[0].mxu0
    %v269 = vpop.f32.mrb[0].mxu0
    %v270 = vadd.f32 %v208, %v269
    %v271 = vpop.f32.mrb[0].mxu0
    %272 = vdwg.mxu0
    %v273 = vmax.f32 %v259, 0.0
    %v274 = vmax.f32 %v262, 0.0
    %v275 = vmax.f32 %v267, 0.0
    %v276 = vmax.f32 %v270, 0.0
    %v278 = vlaneseq
    %v279 = vshrl.u32 %v278, 7
    %v280 = vsub.s32 0, %v279
    %v281 = vrot.slane %v200, %v280
    %v283 = vmul.f32 %v273, %v281
    %v284 = vmul.f32 %v274, %v281
    %v285 = vmul.f32 %v275, %v281
    %v286 = vmul.f32 %v276, %v281
    %v288 = vlaneseq
    %v289 = vshrl.u32 %v288, 7
    %v290 = vsub.s32 0, %v289
    %v291 = vrot.slane %v201, %v290
    %v293 = vadd.f32 %v283, %v291
    %v294 = vadd.f32 %v284, %v291
    %v295 = vadd.f32 %v285, %v291
    %v296 = vadd.f32 %v286, %v291
    %v297 = vld [vmem:[%s6] sm:$0xf]
    %v298 = vld [vmem:[%s6 + $0x4] sm:$0xf]
    %v299 = vld [vmem:[%s6 + $0x8] sm:$0xf]
    %v300 = vld [vmem:[%s6 + $0xc] sm:$0xf]
    %v301 = vld [vmem:[%s6 + $0x10] sm:$0xf]
    %v302 = vld [vmem:[%s6 + $0x14] sm:$0xf]
    %v303 = vld [vmem:[%s6 + $0x18] sm:$0xf]
    %v304 = vld [vmem:[%s6 + $0x1c] sm:$0xf]
    %v305 = vld [vmem:[#allocation8] sm:$0x1]
    %v306 = vld [vmem:[#allocation10] sm:$0x1]
    %v307 = vld [vmem:[#allocation11] sm:$0x1]
    %v308 = vpack.c.bf16 %v294, %v293
    %v309 = vpack.c.bf16 %v296, %v295
    %v311 = vlaneseq
    %v312 = vshrl.u32 %v311, 7
    %v313 = vsub.s32 0, %v312
    %v314 = vrot.slane %v305, %v313
    %v324 = vunpack.c.l.b16 %v297
    %v325 = vunpack.c.l.b16 %v298
    %v326 = vunpack.c.l.b16 %v299
    %v327 = vunpack.c.l.b16 %v300
    %v328 = vunpack.c.l.b16 %v301
    %v329 = vunpack.c.l.b16 %v302
    %v330 = vunpack.c.l.b16 %v303
    %v331 = vunpack.c.l.b16 %v304
    %v332 = vpack.c.b16 %v325, %v324
    %v333 = vpack.c.b16 %v327, %v326
    %v334 = vpack.c.b16 %v329, %v328
    %v335 = vpack.c.b16 %v331, %v330
    %vm340 = vcmask 523264
    %v342 = vsel %vm340, %v308, 0
    %v345 = vsel %vm340, %v309, 0
    %347 = vmatprep.subr.bf16.mxu0 0
    %348 = vmatpush1.bf16.msra.mxu0 %v332
    %349 = vmatprep.subr.bf16.mxu0 0
    %350 = vmatpush1.bf16.msra.mxu0 %v333
    %351 = vmatprep.subr.bf16.mxu0 0
    %352 = vmatpush1.bf16.msra.mxu0 %v334
    %353 = vmatprep.subr.bf16.mxu0 0
    %354 = vmatpush1.bf16.msra.mxu0 %v335
    %355 = vmatprep.subr.bf16.mxu0 0
    %356 = vmatpush1.bf16.msra.mxu0 0
    %357 = vmatprep.subr.bf16.mxu0 0
    %358 = vmatpush1.bf16.msra.mxu0 0
    %359 = vmatprep.subr.bf16.mxu0 0
    %360 = vmatpush1.bf16.msra.mxu0 0
    %361 = vmatprep.subr.bf16.mxu0 0
    %362 = vmatpush1.bf16.msra.mxu0 0
    %363 = vmatprep.subr.bf16.mxu0 0
    %364 = vmatpush1.bf16.msra.mxu0 0
    %365 = vmatprep.subr.bf16.mxu0 0
    %366 = vmatpush1.bf16.msra.mxu0 0
    %367 = vmatprep.subr.bf16.mxu0 0
    %368 = vmatpush1.bf16.msra.mxu0 0
    %369 = vmatprep.subr.bf16.mxu0 0
    %370 = vmatpush1.bf16.msra.mxu0 0
    %371 = vmatprep.subr.bf16.mxu0 0
    %372 = vmatpush1.bf16.msra.mxu0 0
    %373 = vmatprep.subr.bf16.mxu0 0
    %374 = vmatpush1.bf16.msra.mxu0 0
    %375 = vmatprep.subr.bf16.mxu0 0
    %376 = vmatpush1.bf16.msra.mxu0 0
    %377 = vmatprep.subr.bf16.mxu0 0
    %378 = vmatpush1.bf16.msra.mxu0 0
    %379 = vmatprep.mubr.bf16.mxu0 0
    %380 = vmatmul.mubr.bf16.gmra.mrb[0].mxu0 %v342
    %v381 = vpop.f32.mrb[0].mxu0
    %v382 = vadd.f32 %v314, %v381
    %v383 = vpop.f32.mrb[0].mxu0
    %v384 = vpop.f32.mrb[0].mxu0
    %v385 = vadd.f32 %v314, %v384
    %v386 = vpop.f32.mrb[0].mxu0
    %387 = vmatprep.mubr.bf16.mxu0 0
    %388 = vmatmul.mubr.bf16.gmra.mrb[0].mxu0 %v345
    %v389 = vpop.f32.mrb[0].mxu0
    %v390 = vadd.f32 %v314, %v389
    %v391 = vpop.f32.mrb[0].mxu0
    %v392 = vpop.f32.mrb[0].mxu0
    %v393 = vadd.f32 %v314, %v392
    %v394 = vpop.f32.mrb[0].mxu0
    %395 = vdwg.mxu0
    %v396 = vmax.f32 %v382, 0.0
    %v397 = vmax.f32 %v385, 0.0
    %v398 = vmax.f32 %v390, 0.0
    %v399 = vmax.f32 %v393, 0.0
    %v401 = vlaneseq
    %v402 = vshrl.u32 %v401, 7
    %v403 = vsub.s32 0, %v402
    %v404 = vrot.slane %v306, %v403
    %v406 = vmul.f32 %v396, %v404
    %v407 = vmul.f32 %v397, %v404
    %v408 = vmul.f32 %v398, %v404
    %v409 = vmul.f32 %v399, %v404
    %v411 = vlaneseq
    %v412 = vshrl.u32 %v411, 7
    %v413 = vsub.s32 0, %v412
    %v414 = vrot.slane %v307, %v413
    %v416 = vadd.f32 %v406, %v414
    %v417 = vadd.f32 %v407, %v414
    %v418 = vadd.f32 %v408, %v414
    %v419 = vadd.f32 %v409, %v414
    %v420 = vld [vmem:[%s10] sm:$0xf]
    %v421 = vld [vmem:[%s10 + $0x4] sm:$0xf]
    %v422 = vld [vmem:[%s10 + $0x8] sm:$0xf]
    %v423 = vld [vmem:[%s10 + $0xc] sm:$0xf]
    %v424 = vld [vmem:[%s10 + $0x10] sm:$0xf]
    %v425 = vld [vmem:[%s10 + $0x14] sm:$0xf]
    %v426 = vld [vmem:[%s10 + $0x18] sm:$0xf]
    %v427 = vld [vmem:[%s10 + $0x1c] sm:$0xf]
    %v428 = vld [vmem:[#allocation13] sm:$0x1]
    %v429 = vld [vmem:[#allocation14] sm:$0x1]
    %v430 = vld [vmem:[#allocation16] sm:$0x1]
    %v431 = vpack.c.bf16 %v417, %v416
    %v432 = vpack.c.bf16 %v419, %v418
    %v434 = vlaneseq
    %v435 = vshrl.u32 %v434, 7
    %v436 = vsub.s32 0, %v435
    %v437 = vrot.slane %v428, %v436
    %v447 = vunpack.c.l.b16 %v420
    %v448 = vunpack.c.l.b16 %v421
    %v449 = vunpack.c.l.b16 %v422
    %v450 = vunpack.c.l.b16 %v423
    %v451 = vunpack.c.l.b16 %v424
    %v452 = vunpack.c.l.b16 %v425
    %v453 = vunpack.c.l.b16 %v426
    %v454 = vunpack.c.l.b16 %v427
    %v455 = vpack.c.b16 %v448, %v447
    %v456 = vpack.c.b16 %v450, %v449
    %v457 = vpack.c.b16 %v452, %v451
    %v458 = vpack.c.b16 %v454, %v453
    %v464 = vsel %vm340, %v431, 0
    %v467 = vsel %vm340, %v432, 0
    %469 = vmatprep.subr.bf16.mxu0 0
    %470 = vmatpush1.bf16.msra.mxu0 %v455
    %471 = vmatprep.subr.bf16.mxu0 0
    %472 = vmatpush1.bf16.msra.mxu0 %v456
    %473 = vmatprep.subr.bf16.mxu0 0
    %474 = vmatpush1.bf16.msra.mxu0 %v457
    %475 = vmatprep.subr.bf16.mxu0 0
    %476 = vmatpush1.bf16.msra.mxu0 %v458
    %477 = vmatprep.subr.bf16.mxu0 0
    %478 = vmatpush1.bf16.msra.mxu0 0
    %479 = vmatprep.subr.bf16.mxu0 0
    %480 = vmatpush1.bf16.msra.mxu0 0
    %481 = vmatprep.subr.bf16.mxu0 0
    %482 = vmatpush1.bf16.msra.mxu0 0
    %483 = vmatprep.subr.bf16.mxu0 0
    %484 = vmatpush1.bf16.msra.mxu0 0
    %485 = vmatprep.subr.bf16.mxu0 0
    %486 = vmatpush1.bf16.msra.mxu0 0
    %487 = vmatprep.subr.bf16.mxu0 0
    %488 = vmatpush1.bf16.msra.mxu0 0
    %489 = vmatprep.subr.bf16.mxu0 0
    %490 = vmatpush1.bf16.msra.mxu0 0
    %491 = vmatprep.subr.bf16.mxu0 0
    %492 = vmatpush1.bf16.msra.mxu0 0
    %493 = vmatprep.subr.bf16.mxu0 0
    %494 = vmatpush1.bf16.msra.mxu0 0
    %495 = vmatprep.subr.bf16.mxu0 0
    %496 = vmatpush1.bf16.msra.mxu0 0
    %497 = vmatprep.subr.bf16.mxu0 0
    %498 = vmatpush1.bf16.msra.mxu0 0
    %499 = vmatprep.subr.bf16.mxu0 0
    %500 = vmatpush1.bf16.msra.mxu0 0
    %501 = vmatprep.mubr.bf16.mxu0 0
    %502 = vmatmul.mubr.bf16.gmra.mrb[0].mxu0 %v464
    %v503 = vpop.f32.mrb[0].mxu0
    %v504 = vadd.f32 %v437, %v503
    %v505 = vpop.f32.mrb[0].mxu0
    %v506 = vpop.f32.mrb[0].mxu0
    %v507 = vadd.f32 %v437, %v506
    %v508 = vpop.f32.mrb[0].mxu0
    %509 = vmatprep.mubr.bf16.mxu0 0
    %510 = vmatmul.mubr.bf16.gmra.mrb[0].mxu0 %v467
    %v511 = vpop.f32.mrb[0].mxu0
    %v512 = vadd.f32 %v437, %v511
    %v513 = vpop.f32.mrb[0].mxu0
    %v514 = vpop.f32.mrb[0].mxu0
    %v515 = vadd.f32 %v437, %v514
    %v516 = vpop.f32.mrb[0].mxu0
    %517 = vdwg.mxu0
    %v518 = vmax.f32 %v504, 0.0
    %v519 = vmax.f32 %v507, 0.0
    %v520 = vmax.f32 %v512, 0.0
    %v521 = vmax.f32 %v515, 0.0
    %v523 = vlaneseq
    %v524 = vshrl.u32 %v523, 7
    %v525 = vsub.s32 0, %v524
    %v526 = vrot.slane %v429, %v525
    %v528 = vmul.f32 %v518, %v526
    %v529 = vmul.f32 %v519, %v526
    %v530 = vmul.f32 %v520, %v526
    %v531 = vmul.f32 %v521, %v526
    %v533 = vlaneseq
    %v534 = vshrl.u32 %v533, 7
    %v535 = vsub.s32 0, %v534
    %v536 = vrot.slane %v430, %v535
    %v538 = vadd.f32 %v528, %v536
    %v539 = vadd.f32 %v529, %v536
    %v540 = vadd.f32 %v530, %v536
    %v541 = vadd.f32 %v531, %v536
    %v542 = vld [vmem:[%s14] sm:$0xf]
    %v543 = vld [vmem:[%s14 + $0x4] sm:$0xf]
    %v544 = vld [vmem:[%s14 + $0x8] sm:$0xf]
    %v545 = vld [vmem:[%s14 + $0xc] sm:$0xf]
    %v546 = vld [vmem:[%s14 + $0x10] sm:$0xf]
    %v547 = vld [vmem:[%s14 + $0x14] sm:$0xf]
    %v548 = vld [vmem:[%s14 + $0x18] sm:$0xf]
    %v549 = vld [vmem:[%s14 + $0x1c] sm:$0xf]
    %v550 = vld [vmem:[%s15] sm:$0x1]
    %v551 = vld [vmem:[%s16] sm:$0x1]
    %v552 = vld [vmem:[%s17] sm:$0x1]
    %v553 = vpack.c.bf16 %v539, %v538
    %v554 = vpack.c.bf16 %v541, %v540
    %v556 = vlaneseq
    %v557 = vshrl.u32 %v556, 7
    %v558 = vsub.s32 0, %v557
    %v559 = vrot.slane %v550, %v558
    %v569 = vunpack.c.l.b16 %v542
    %v570 = vunpack.c.l.b16 %v543
    %v571 = vunpack.c.l.b16 %v544
    %v572 = vunpack.c.l.b16 %v545
    %v573 = vunpack.c.l.b16 %v546
    %v574 = vunpack.c.l.b16 %v547
    %v575 = vunpack.c.l.b16 %v548
    %v576 = vunpack.c.l.b16 %v549
    %v577 = vpack.c.b16 %v570, %v569
    %v578 = vpack.c.b16 %v572, %v571
    %v579 = vpack.c.b16 %v574, %v573
    %v580 = vpack.c.b16 %v576, %v575
    %v586 = vsel %vm340, %v553, 0
    %v589 = vsel %vm340, %v554, 0
    %591 = vmatprep.subr.bf16.mxu0 0
    %592 = vmatpush1.bf16.msra.mxu0 %v577
    %593 = vmatprep.subr.bf16.mxu0 0
    %594 = vmatpush1.bf16.msra.mxu0 %v578
    %595 = vmatprep.subr.bf16.mxu0 0
    %596 = vmatpush1.bf16.msra.mxu0 %v579
    %597 = vmatprep.subr.bf16.mxu0 0
    %598 = vmatpush1.bf16.msra.mxu0 %v580
    %599 = vmatprep.subr.bf16.mxu0 0
    %600 = vmatpush1.bf16.msra.mxu0 0
    %601 = vmatprep.subr.bf16.mxu0 0
    %602 = vmatpush1.bf16.msra.mxu0 0
    %603 = vmatprep.subr.bf16.mxu0 0
    %604 = vmatpush1.bf16.msra.mxu0 0
    %605 = vmatprep.subr.bf16.mxu0 0
    %606 = vmatpush1.bf16.msra.mxu0 0
    %607 = vmatprep.subr.bf16.mxu0 0
    %608 = vmatpush1.bf16.msra.mxu0 0
    %609 = vmatprep.subr.bf16.mxu0 0
    %610 = vmatpush1.bf16.msra.mxu0 0
    %611 = vmatprep.subr.bf16.mxu0 0
    %612 = vmatpush1.bf16.msra.mxu0 0
    %613 = vmatprep.subr.bf16.mxu0 0
    %614 = vmatpush1.bf16.msra.mxu0 0
    %615 = vmatprep.subr.bf16.mxu0 0
    %616 = vmatpush1.bf16.msra.mxu0 0
    %617 = vmatprep.subr.bf16.mxu0 0
    %618 = vmatpush1.bf16.msra.mxu0 0
    %619 = vmatprep.subr.bf16.mxu0 0
    %620 = vmatpush1.bf16.msra.mxu0 0
    %621 = vmatprep.subr.bf16.mxu0 0
    %622 = vmatpush1.bf16.msra.mxu0 0
    %623 = vmatprep.mubr.bf16.mxu0 0
    %624 = vmatmul.mubr.bf16.gmra.mrb[0].mxu0 %v586
    %v625 = vpop.f32.mrb[0].mxu0
    %v626 = vadd.f32 %v559, %v625
    %v627 = vpop.f32.mrb[0].mxu0
    %v628 = vpop.f32.mrb[0].mxu0
    %v629 = vadd.f32 %v559, %v628
    %v630 = vpop.f32.mrb[0].mxu0
    %631 = vmatprep.mubr.bf16.mxu0 0
    %632 = vmatmul.mubr.bf16.gmra.mrb[0].mxu0 %v589
    %v633 = vpop.f32.mrb[0].mxu0
    %v634 = vadd.f32 %v559, %v633
    %v635 = vpop.f32.mrb[0].mxu0
    %v636 = vpop.f32.mrb[0].mxu0
    %v637 = vadd.f32 %v559, %v636
    %v638 = vpop.f32.mrb[0].mxu0
    %639 = vdwg.mxu0
    %v640 = vmax.f32 %v626, 0.0
    %v641 = vmax.f32 %v629, 0.0
    %v642 = vmax.f32 %v634, 0.0
    %v643 = vmax.f32 %v637, 0.0
    %v645 = vlaneseq
    %v646 = vshrl.u32 %v645, 7
    %v647 = vsub.s32 0, %v646
    %v648 = vrot.slane %v551, %v647
    %v650 = vmul.f32 %v640, %v648
    %v651 = vmul.f32 %v641, %v648
    %v652 = vmul.f32 %v642, %v648
    %v653 = vmul.f32 %v643, %v648
    %v655 = vlaneseq
    %v656 = vshrl.u32 %v655, 7
    %v657 = vsub.s32 0, %v656
    %v658 = vrot.slane %v552, %v657
    %v660 = vadd.f32 %v650, %v658
    %v661 = vadd.f32 %v651, %v658
    %v662 = vadd.f32 %v652, %v658
    %v663 = vadd.f32 %v653, %v658
    %v664 = vld [vmem:[#allocation17] sm:$0xff]
    %v665 = vld [vmem:[#allocation17 + $0x8] sm:$0xff]
    %v666 = vld [vmem:[#allocation17 + $0x10] sm:$0xff]
    %v667 = vld [vmem:[#allocation17 + $0x18] sm:$0xff]
    %v668 = vld [vmem:[#allocation17 + $0x20] sm:$0xff]
    %v669 = vld [vmem:[#allocation17 + $0x28] sm:$0xff]
    %v670 = vld [vmem:[#allocation17 + $0x30] sm:$0xff]
    %v671 = vld [vmem:[#allocation17 + $0x38] sm:$0xff]
    %v672 = vld [vmem:[#allocation17 + $0x40] sm:$0xff]
    %v673 = vld [vmem:[#allocation17 + $0x48] sm:$0xff]
    %v674 = vld [vmem:[#allocation17 + $0x50] sm:$0xff]
    %v675 = vld [vmem:[#allocation17 + $0x58] sm:$0xff]
    %v676 = vld [vmem:[#allocation17 + $0x60] sm:$0xff]
    %v677 = vld [vmem:[#allocation17 + $0x68] sm:$0xff]
    %v678 = vld [vmem:[#allocation17 + $0x70] sm:$0xff]
    %v679 = vld [vmem:[#allocation17 + $0x78] sm:$0xff]
    %v680 = vld [vmem:[#allocation17 + $0x80] sm:$0xff]
    %v681 = vld [vmem:[#allocation17 + $0x88] sm:$0xff]
    %v682 = vld [vmem:[#allocation17 + $0x90] sm:$0xff]
    %v683 = vld [vmem:[#allocation17 + $0x98] sm:$0xff]
    %v684 = vld [vmem:[#allocation17 + $0xa0] sm:$0xff]
    %v685 = vld [vmem:[#allocation17 + $0xa8] sm:$0xff]
    %v686 = vld [vmem:[#allocation17 + $0xb0] sm:$0xff]
    %v687 = vld [vmem:[#allocation17 + $0xb8] sm:$0xff]
    %v688 = vld [vmem:[#allocation17 + $0xc0] sm:$0xff]
    %v689 = vld [vmem:[#allocation17 + $0xc8] sm:$0xff]
    %v690 = vld [vmem:[#allocation17 + $0xd0] sm:$0xff]
    %v691 = vld [vmem:[#allocation17 + $0xd8] sm:$0xff]
    %v692 = vld [vmem:[#allocation17 + $0xe0] sm:$0xff]
    %v693 = vld [vmem:[#allocation17 + $0xe8] sm:$0xff]
    %v694 = vld [vmem:[#allocation17 + $0xf0] sm:$0xff]
    %v695 = vld [vmem:[#allocation17 + $0xf8] sm:$0xff]
    %v696 = vld [vmem:[#allocation17 + $0x100] sm:$0xff]
    %v697 = vld [vmem:[#allocation17 + $0x108] sm:$0xff]
    %v698 = vld [vmem:[#allocation17 + $0x110] sm:$0xff]
    %v699 = vld [vmem:[#allocation17 + $0x118] sm:$0xff]
    %v700 = vld [vmem:[#allocation17 + $0x120] sm:$0xff]
    %v701 = vld [vmem:[#allocation17 + $0x128] sm:$0xff]
    %v702 = vld [vmem:[#allocation17 + $0x130] sm:$0xff]
    %v703 = vld [vmem:[#allocation17 + $0x138] sm:$0xff]
    %v704 = vld [vmem:[#allocation17 + $0x140] sm:$0xff]
    %v705 = vld [vmem:[#allocation17 + $0x148] sm:$0xff]
    %v706 = vld [vmem:[#allocation17 + $0x150] sm:$0xff]
    %v707 = vld [vmem:[#allocation17 + $0x158] sm:$0xff]
    %v708 = vld [vmem:[#allocation17 + $0x160] sm:$0xff]
    %v709 = vld [vmem:[#allocation17 + $0x168] sm:$0xff]
    %v710 = vld [vmem:[#allocation17 + $0x170] sm:$0xff]
    %v711 = vld [vmem:[#allocation17 + $0x178] sm:$0xff]
    %v712 = vld [vmem:[#allocation17 + $0x180] sm:$0xff]
    %v713 = vld [vmem:[#allocation17 + $0x188] sm:$0xff]
    %v714 = vld [vmem:[#allocation17 + $0x190] sm:$0xff]
    %v715 = vld [vmem:[#allocation17 + $0x198] sm:$0xff]
    %v716 = vld [vmem:[#allocation17 + $0x1a0] sm:$0xff]
    %v717 = vld [vmem:[#allocation17 + $0x1a8] sm:$0xff]
    %v718 = vld [vmem:[#allocation17 + $0x1b0] sm:$0xff]
    %v719 = vld [vmem:[#allocation17 + $0x1b8] sm:$0xff]
    %v720 = vld [vmem:[#allocation17 + $0x1c0] sm:$0xff]
    %v721 = vld [vmem:[#allocation17 + $0x1c8] sm:$0xff]
    %v722 = vld [vmem:[#allocation17 + $0x1d0] sm:$0xff]
    %v723 = vld [vmem:[#allocation17 + $0x1d8] sm:$0xff]
    %v724 = vld [vmem:[#allocation17 + $0x1e0] sm:$0xff]
    %v725 = vld [vmem:[#allocation17 + $0x1e8] sm:$0xff]
    %v726 = vld [vmem:[#allocation17 + $0x1f0] sm:$0xff]
    %v727 = vld [vmem:[#allocation17 + $0x1f8] sm:$0xff]
    %v728 = vld [vmem:[%s19] sm:$0xff]
    %v729 = vld [vmem:[%s20] sm:$0xff]
    %v730 = vld [vmem:[%s21] sm:$0xff]
    %v731 = vpack.c.bf16 %v661, %v660
    %v732 = vpack.c.bf16 %v663, %v662
    %v734 = vlaneseq
    %v735 = vshrl.u32 %v734, 7
    %v736 = vsub.s32 0, %v735
    %v737 = vrot.slane %v728, %v736
    %v738 = vlaneseq
    %v739 = vshrl.u32 %v738, 7
    %v740 = vsub.s32 1, %v739
    %v741 = vrot.slane %v728, %v740
    %v742 = vlaneseq
    %v743 = vshrl.u32 %v742, 7
    %v744 = vsub.s32 2, %v743
    %v745 = vrot.slane %v728, %v744
    %v746 = vlaneseq
    %v747 = vshrl.u32 %v746, 7
    %v748 = vsub.s32 3, %v747
    %v749 = vrot.slane %v728, %v748
    %v750 = vlaneseq
    %v751 = vshrl.u32 %v750, 7
    %v752 = vsub.s32 4, %v751
    %v753 = vrot.slane %v728, %v752
    %v754 = vlaneseq
    %v755 = vshrl.u32 %v754, 7
    %v756 = vsub.s32 5, %v755
    %v757 = vrot.slane %v728, %v756
    %v758 = vlaneseq
    %v759 = vshrl.u32 %v758, 7
    %v760 = vsub.s32 6, %v759
    %v761 = vrot.slane %v728, %v760
    %v762 = vlaneseq
    %v763 = vshrl.u32 %v762, 7
    %v764 = vsub.s32 7, %v763
    %v765 = vrot.slane %v728, %v764
    %v838 = vunpack.c.l.b16 %v664
    %v839 = vunpack.c.h.b16 %v664
    %v840 = vunpack.c.l.b16 %v665
    %v841 = vunpack.c.h.b16 %v665
    %v842 = vunpack.c.l.b16 %v666
    %v843 = vunpack.c.h.b16 %v666
    %v844 = vunpack.c.l.b16 %v667
    %v845 = vunpack.c.h.b16 %v667
    %v846 = vunpack.c.l.b16 %v668
    %v847 = vunpack.c.h.b16 %v668
    %v848 = vunpack.c.l.b16 %v669
    %v849 = vunpack.c.h.b16 %v669
    %v850 = vunpack.c.l.b16 %v670
    %v851 = vunpack.c.h.b16 %v670
    %v852 = vunpack.c.l.b16 %v671
    %v853 = vunpack.c.h.b16 %v671
    %v854 = vunpack.c.l.b16 %v672
    %v855 = vunpack.c.h.b16 %v672
    %v856 = vunpack.c.l.b16 %v673
    %v857 = vunpack.c.h.b16 %v673
    %v858 = vunpack.c.l.b16 %v674
    %v859 = vunpack.c.h.b16 %v674
    %v860 = vunpack.c.l.b16 %v675
    %v861 = vunpack.c.h.b16 %v675
    %v862 = vunpack.c.l.b16 %v676
    %v863 = vunpack.c.h.b16 %v676
    %v864 = vunpack.c.l.b16 %v677
    %v865 = vunpack.c.h.b16 %v677
    %v866 = vunpack.c.l.b16 %v678
    %v867 = vunpack.c.h.b16 %v678
    %v868 = vunpack.c.l.b16 %v679
    %v869 = vunpack.c.h.b16 %v679
    %v870 = vunpack.c.l.b16 %v680
    %v871 = vunpack.c.h.b16 %v680
    %v872 = vunpack.c.l.b16 %v681
    %v873 = vunpack.c.h.b16 %v681
    %v874 = vunpack.c.l.b16 %v682
    %v875 = vunpack.c.h.b16 %v682
    %v876 = vunpack.c.l.b16 %v683
    %v877 = vunpack.c.h.b16 %v683
    %v878 = vunpack.c.l.b16 %v684
    %v879 = vunpack.c.h.b16 %v684
    %v880 = vunpack.c.l.b16 %v685
    %v881 = vunpack.c.h.b16 %v685
    %v882 = vunpack.c.l.b16 %v686
    %v883 = vunpack.c.h.b16 %v686
    %v884 = vunpack.c.l.b16 %v687
    %v885 = vunpack.c.h.b16 %v687
    %v886 = vunpack.c.l.b16 %v688
    %v887 = vunpack.c.h.b16 %v688
    %v888 = vunpack.c.l.b16 %v689
    %v889 = vunpack.c.h.b16 %v689
    %v890 = vunpack.c.l.b16 %v690
    %v891 = vunpack.c.h.b16 %v690
    %v892 = vunpack.c.l.b16 %v691
    %v893 = vunpack.c.h.b16 %v691
    %v894 = vunpack.c.l.b16 %v692
    %v895 = vunpack.c.h.b16 %v692
    %v896 = vunpack.c.l.b16 %v693
    %v897 = vunpack.c.h.b16 %v693
    %v898 = vunpack.c.l.b16 %v694
    %v899 = vunpack.c.h.b16 %v694
    %v900 = vunpack.c.l.b16 %v695
    %v901 = vunpack.c.h.b16 %v695
    %v902 = vunpack.c.l.b16 %v696
    %v903 = vunpack.c.h.b16 %v696
    %v904 = vunpack.c.l.b16 %v697
    %v905 = vunpack.c.h.b16 %v697
    %v906 = vunpack.c.l.b16 %v698
    %v907 = vunpack.c.h.b16 %v698
    %v908 = vunpack.c.l.b16 %v699
    %v909 = vunpack.c.h.b16 %v699
    %v910 = vunpack.c.l.b16 %v700
    %v911 = vunpack.c.h.b16 %v700
    %v912 = vunpack.c.l.b16 %v701
    %v913 = vunpack.c.h.b16 %v701
    %v914 = vunpack.c.l.b16 %v702
    %v915 = vunpack.c.h.b16 %v702
    %v916 = vunpack.c.l.b16 %v703
    %v917 = vunpack.c.h.b16 %v703
    %v918 = vunpack.c.l.b16 %v704
    %v919 = vunpack.c.h.b16 %v704
    %v920 = vunpack.c.l.b16 %v705
    %v921 = vunpack.c.h.b16 %v705
    %v922 = vunpack.c.l.b16 %v706
    %v923 = vunpack.c.h.b16 %v706
    %v924 = vunpack.c.l.b16 %v707
    %v925 = vunpack.c.h.b16 %v707
    %v926 = vunpack.c.l.b16 %v708
    %v927 = vunpack.c.h.b16 %v708
    %v928 = vunpack.c.l.b16 %v709
    %v929 = vunpack.c.h.b16 %v709
    %v930 = vunpack.c.l.b16 %v710
    %v931 = vunpack.c.h.b16 %v710
    %v932 = vunpack.c.l.b16 %v711
    %v933 = vunpack.c.h.b16 %v711
    %v934 = vunpack.c.l.b16 %v712
    %v935 = vunpack.c.h.b16 %v712
    %v936 = vunpack.c.l.b16 %v713
    %v937 = vunpack.c.h.b16 %v713
    %v938 = vunpack.c.l.b16 %v714
    %v939 = vunpack.c.h.b16 %v714
    %v940 = vunpack.c.l.b16 %v715
    %v941 = vunpack.c.h.b16 %v715
    %v942 = vunpack.c.l.b16 %v716
    %v943 = vunpack.c.h.b16 %v716
    %v944 = vunpack.c.l.b16 %v717
    %v945 = vunpack.c.h.b16 %v717
    %v946 = vunpack.c.l.b16 %v718
    %v947 = vunpack.c.h.b16 %v718
    %v948 = vunpack.c.l.b16 %v719
    %v949 = vunpack.c.h.b16 %v719
    %v950 = vunpack.c.l.b16 %v720
    %v951 = vunpack.c.h.b16 %v720
    %v952 = vunpack.c.l.b16 %v721
    %v953 = vunpack.c.h.b16 %v721
    %v954 = vunpack.c.l.b16 %v722
    %v955 = vunpack.c.h.b16 %v722
    %v956 = vunpack.c.l.b16 %v723
    %v957 = vunpack.c.h.b16 %v723
    %v958 = vunpack.c.l.b16 %v724
    %v959 = vunpack.c.h.b16 %v724
    %v960 = vunpack.c.l.b16 %v725
    %v961 = vunpack.c.h.b16 %v725
    %v962 = vunpack.c.l.b16 %v726
    %v963 = vunpack.c.h.b16 %v726
    %v964 = vunpack.c.l.b16 %v727
    %v965 = vunpack.c.h.b16 %v727
    %v966 = vpack.c.b16 %v846, %v838
    %v967 = vpack.c.b16 %v847, %v839
    %v968 = vpack.c.b16 %v848, %v840
    %v969 = vpack.c.b16 %v849, %v841
    %v970 = vpack.c.b16 %v850, %v842
    %v971 = vpack.c.b16 %v851, %v843
    %v972 = vpack.c.b16 %v852, %v844
    %v973 = vpack.c.b16 %v853, %v845
    %v974 = vpack.c.b16 %v862, %v854
    %v975 = vpack.c.b16 %v863, %v855
    %v976 = vpack.c.b16 %v864, %v856
    %v977 = vpack.c.b16 %v865, %v857
    %v978 = vpack.c.b16 %v866, %v858
    %v979 = vpack.c.b16 %v867, %v859
    %v980 = vpack.c.b16 %v868, %v860
    %v981 = vpack.c.b16 %v869, %v861
    %v982 = vpack.c.b16 %v878, %v870
    %v983 = vpack.c.b16 %v879, %v871
    %v984 = vpack.c.b16 %v880, %v872
    %v985 = vpack.c.b16 %v881, %v873
    %v986 = vpack.c.b16 %v882, %v874
    %v987 = vpack.c.b16 %v883, %v875
    %v988 = vpack.c.b16 %v884, %v876
    %v989 = vpack.c.b16 %v885, %v877
    %v990 = vpack.c.b16 %v894, %v886
    %v991 = vpack.c.b16 %v895, %v887
    %v992 = vpack.c.b16 %v896, %v888
    %v993 = vpack.c.b16 %v897, %v889
    %v994 = vpack.c.b16 %v898, %v890
    %v995 = vpack.c.b16 %v899, %v891
    %v996 = vpack.c.b16 %v900, %v892
    %v997 = vpack.c.b16 %v901, %v893
    %v998 = vpack.c.b16 %v910, %v902
    %v999 = vpack.c.b16 %v911, %v903
    %v1000 = vpack.c.b16 %v912, %v904
    %v1001 = vpack.c.b16 %v913, %v905
    %v1002 = vpack.c.b16 %v914, %v906
    %v1003 = vpack.c.b16 %v915, %v907
    %v1004 = vpack.c.b16 %v916, %v908
    %v1005 = vpack.c.b16 %v917, %v909
    %v1006 = vpack.c.b16 %v926, %v918
    %v1007 = vpack.c.b16 %v927, %v919
    %v1008 = vpack.c.b16 %v928, %v920
    %v1009 = vpack.c.b16 %v929, %v921
    %v1010 = vpack.c.b16 %v930, %v922
    %v1011 = vpack.c.b16 %v931, %v923
    %v1012 = vpack.c.b16 %v932, %v924
    %v1013 = vpack.c.b16 %v933, %v925
    %v1014 = vpack.c.b16 %v942, %v934
    %v1015 = vpack.c.b16 %v943, %v935
    %v1016 = vpack.c.b16 %v944, %v936
    %v1017 = vpack.c.b16 %v945, %v937
    %v1018 = vpack.c.b16 %v946, %v938
    %v1019 = vpack.c.b16 %v947, %v939
    %v1020 = vpack.c.b16 %v948, %v940
    %v1021 = vpack.c.b16 %v949, %v941
    %v1022 = vpack.c.b16 %v958, %v950
    %v1023 = vpack.c.b16 %v959, %v951
    %v1024 = vpack.c.b16 %v960, %v952
    %v1025 = vpack.c.b16 %v961, %v953
    %v1026 = vpack.c.b16 %v962, %v954
    %v1027 = vpack.c.b16 %v963, %v955
    %v1028 = vpack.c.b16 %v964, %v956
    %v1029 = vpack.c.b16 %v965, %v957
    %1094 = vmatprep.subr.bf16.mxu0 %v967
    %1095 = vmatpush1.bf16.msra.mxu0 %v966
    %1096 = vmatprep.subr.bf16.mxu0 %v975
    %1097 = vmatpush1.bf16.msra.mxu0 %v974
    %1098 = vmatprep.subr.bf16.mxu0 %v983
    %1099 = vmatpush1.bf16.msra.mxu0 %v982
    %1100 = vmatprep.subr.bf16.mxu0 %v991
    %1101 = vmatpush1.bf16.msra.mxu0 %v990
    %1102 = vmatprep.subr.bf16.mxu0 %v999
    %1103 = vmatpush1.bf16.msra.mxu0 %v998
    %1104 = vmatprep.subr.bf16.mxu0 %v1007
    %1105 = vmatpush1.bf16.msra.mxu0 %v1006
    %1106 = vmatprep.subr.bf16.mxu0 %v1015
    %1107 = vmatpush1.bf16.msra.mxu0 %v1014
    %1108 = vmatprep.subr.bf16.mxu0 %v1023
    %1109 = vmatpush1.bf16.msra.mxu0 %v1022
    %1110 = vmatprep.subr.bf16.mxu0 0
    %1111 = vmatpush1.bf16.msra.mxu0 0
    %1112 = vmatprep.subr.bf16.mxu0 0
    %1113 = vmatpush1.bf16.msra.mxu0 0
    %1114 = vmatprep.subr.bf16.mxu0 0
    %1115 = vmatpush1.bf16.msra.mxu0 0
    %1116 = vmatprep.subr.bf16.mxu0 0
    %1117 = vmatpush1.bf16.msra.mxu0 0
    %1118 = vmatprep.subr.bf16.mxu0 0
    %1119 = vmatpush1.bf16.msra.mxu0 0
    %1120 = vmatprep.subr.bf16.mxu0 0
    %1121 = vmatpush1.bf16.msra.mxu0 0
    %1122 = vmatprep.subr.bf16.mxu0 0
    %1123 = vmatpush1.bf16.msra.mxu0 0
    %1124 = vmatprep.subr.bf16.mxu0 0
    %1125 = vmatpush1.bf16.msra.mxu0 0
    %1126 = vmatprep.mubr.bf16.mxu0 0
    %1127 = vmatmul.mubr.bf16.gmra.mrb[0].mxu0 %v731
    %v1128 = vpop.f32.mrb[0].mxu0
    %v1129 = vadd.f32 %v737, %v1128
    %v1130 = vpop.f32.mrb[0].mxu0
    %v1131 = vadd.f32 %v741, %v1130
    %v1132 = vpop.f32.mrb[0].mxu0
    %v1133 = vadd.f32 %v737, %v1132
    %v1134 = vpop.f32.mrb[0].mxu0
    %v1135 = vadd.f32 %v741, %v1134
    %1136 = vmatprep.mubr.bf16.mxu0 0
    %1137 = vmatmul.mubr.bf16.gmra.mrb[0].mxu0 %v732
    %v1138 = vpop.f32.mrb[0].mxu0
    %v1139 = vadd.f32 %v737, %v1138
    %v1140 = vpop.f32.mrb[0].mxu0
    %v1141 = vadd.f32 %v741, %v1140
    %v1142 = vpop.f32.mrb[0].mxu0
    %v1143 = vadd.f32 %v737, %v1142
    %v1144 = vpop.f32.mrb[0].mxu0
    %v1145 = vadd.f32 %v741, %v1144
    %1146 = vdwg.mxu0
    %1147 = vmatprep.subr.bf16.mxu0 %v969
    %1148 = vmatpush1.bf16.msra.mxu0 %v968
    %1149 = vmatprep.subr.bf16.mxu0 %v977
    %1150 = vmatpush1.bf16.msra.mxu0 %v976
    %1151 = vmatprep.subr.bf16.mxu0 %v985
    %1152 = vmatpush1.bf16.msra.mxu0 %v984
    %1153 = vmatprep.subr.bf16.mxu0 %v993
    %1154 = vmatpush1.bf16.msra.mxu0 %v992
    %1155 = vmatprep.subr.bf16.mxu0 %v1001
    %1156 = vmatpush1.bf16.msra.mxu0 %v1000
    %1157 = vmatprep.subr.bf16.mxu0 %v1009
    %1158 = vmatpush1.bf16.msra.mxu0 %v1008
    %1159 = vmatprep.subr.bf16.mxu0 %v1017
    %1160 = vmatpush1.bf16.msra.mxu0 %v1016
    %1161 = vmatprep.subr.bf16.mxu0 %v1025
    %1162 = vmatpush1.bf16.msra.mxu0 %v1024
    %1163 = vmatprep.subr.bf16.mxu0 0
    %1164 = vmatpush1.bf16.msra.mxu0 0
    %1165 = vmatprep.subr.bf16.mxu0 0
    %1166 = vmatpush1.bf16.msra.mxu0 0
    %1167 = vmatprep.subr.bf16.mxu0 0
    %1168 = vmatpush1.bf16.msra.mxu0 0
    %1169 = vmatprep.subr.bf16.mxu0 0
    %1170 = vmatpush1.bf16.msra.mxu0 0
    %1171 = vmatprep.subr.bf16.mxu0 0
    %1172 = vmatpush1.bf16.msra.mxu0 0
    %1173 = vmatprep.subr.bf16.mxu0 0
    %1174 = vmatpush1.bf16.msra.mxu0 0
    %1175 = vmatprep.subr.bf16.mxu0 0
    %1176 = vmatpush1.bf16.msra.mxu0 0
    %1177 = vmatprep.subr.bf16.mxu0 0
    %1178 = vmatpush1.bf16.msra.mxu0 0
    %1179 = vmatprep.mubr.bf16.mxu0 0
    %1180 = vmatmul.mubr.bf16.gmra.mrb[0].mxu0 %v731
    %v1181 = vpop.f32.mrb[0].mxu0
    %v1182 = vadd.f32 %v745, %v1181
    %v1183 = vpop.f32.mrb[0].mxu0
    %v1184 = vadd.f32 %v749, %v1183
    %v1185 = vpop.f32.mrb[0].mxu0
    %v1186 = vadd.f32 %v745, %v1185
    %v1187 = vpop.f32.mrb[0].mxu0
    %v1188 = vadd.f32 %v749, %v1187
    %1189 = vmatprep.mubr.bf16.mxu0 0
    %1190 = vmatmul.mubr.bf16.gmra.mrb[0].mxu0 %v732
    %v1191 = vpop.f32.mrb[0].mxu0
    %v1192 = vadd.f32 %v745, %v1191
    %v1193 = vpop.f32.mrb[0].mxu0
    %v1194 = vadd.f32 %v749, %v1193
    %v1195 = vpop.f32.mrb[0].mxu0
    %v1196 = vadd.f32 %v745, %v1195
    %v1197 = vpop.f32.mrb[0].mxu0
    %v1198 = vadd.f32 %v749, %v1197
    %1199 = vdwg.mxu0
    %1200 = vmatprep.subr.bf16.mxu0 %v971
    %1201 = vmatpush1.bf16.msra.mxu0 %v970
    %1202 = vmatprep.subr.bf16.mxu0 %v979
    %1203 = vmatpush1.bf16.msra.mxu0 %v978
    %1204 = vmatprep.subr.bf16.mxu0 %v987
    %1205 = vmatpush1.bf16.msra.mxu0 %v986
    %1206 = vmatprep.subr.bf16.mxu0 %v995
    %1207 = vmatpush1.bf16.msra.mxu0 %v994
    %1208 = vmatprep.subr.bf16.mxu0 %v1003
    %1209 = vmatpush1.bf16.msra.mxu0 %v1002
    %1210 = vmatprep.subr.bf16.mxu0 %v1011
    %1211 = vmatpush1.bf16.msra.mxu0 %v1010
    %1212 = vmatprep.subr.bf16.mxu0 %v1019
    %1213 = vmatpush1.bf16.msra.mxu0 %v1018
    %1214 = vmatprep.subr.bf16.mxu0 %v1027
    %1215 = vmatpush1.bf16.msra.mxu0 %v1026
    %1216 = vmatprep.subr.bf16.mxu0 0
    %1217 = vmatpush1.bf16.msra.mxu0 0
    %1218 = vmatprep.subr.bf16.mxu0 0
    %1219 = vmatpush1.bf16.msra.mxu0 0
    %1220 = vmatprep.subr.bf16.mxu0 0
    %1221 = vmatpush1.bf16.msra.mxu0 0
    %1222 = vmatprep.subr.bf16.mxu0 0
    %1223 = vmatpush1.bf16.msra.mxu0 0
    %1224 = vmatprep.subr.bf16.mxu0 0
    %1225 = vmatpush1.bf16.msra.mxu0 0
    %1226 = vmatprep.subr.bf16.mxu0 0
    %1227 = vmatpush1.bf16.msra.mxu0 0
    %1228 = vmatprep.subr.bf16.mxu0 0
    %1229 = vmatpush1.bf16.msra.mxu0 0
    %1230 = vmatprep.subr.bf16.mxu0 0
    %1231 = vmatpush1.bf16.msra.mxu0 0
    %1232 = vmatprep.mubr.bf16.mxu0 0
    %1233 = vmatmul.mubr.bf16.gmra.mrb[0].mxu0 %v731
    %v1234 = vpop.f32.mrb[0].mxu0
    %v1235 = vadd.f32 %v753, %v1234
    %v1236 = vpop.f32.mrb[0].mxu0
    %v1237 = vadd.f32 %v757, %v1236
    %v1238 = vpop.f32.mrb[0].mxu0
    %v1239 = vadd.f32 %v753, %v1238
    %v1240 = vpop.f32.mrb[0].mxu0
    %v1241 = vadd.f32 %v757, %v1240
    %1242 = vmatprep.mubr.bf16.mxu0 0
    %1243 = vmatmul.mubr.bf16.gmra.mrb[0].mxu0 %v732
    %v1244 = vpop.f32.mrb[0].mxu0
    %v1245 = vadd.f32 %v753, %v1244
    %v1246 = vpop.f32.mrb[0].mxu0
    %v1247 = vadd.f32 %v757, %v1246
    %v1248 = vpop.f32.mrb[0].mxu0
    %v1249 = vadd.f32 %v753, %v1248
    %v1250 = vpop.f32.mrb[0].mxu0
    %v1251 = vadd.f32 %v757, %v1250
    %1252 = vdwg.mxu0
    %1253 = vmatprep.subr.bf16.mxu0 %v973
    %1254 = vmatpush1.bf16.msra.mxu0 %v972
    %1255 = vmatprep.subr.bf16.mxu0 %v981
    %1256 = vmatpush1.bf16.msra.mxu0 %v980
    %1257 = vmatprep.subr.bf16.mxu0 %v989
    %1258 = vmatpush1.bf16.msra.mxu0 %v988
    %1259 = vmatprep.subr.bf16.mxu0 %v997
    %1260 = vmatpush1.bf16.msra.mxu0 %v996
    %1261 = vmatprep.subr.bf16.mxu0 %v1005
    %1262 = vmatpush1.bf16.msra.mxu0 %v1004
    %1263 = vmatprep.subr.bf16.mxu0 %v1013
    %1264 = vmatpush1.bf16.msra.mxu0 %v1012
    %1265 = vmatprep.subr.bf16.mxu0 %v1021
    %1266 = vmatpush1.bf16.msra.mxu0 %v1020
    %1267 = vmatprep.subr.bf16.mxu0 %v1029
    %1268 = vmatpush1.bf16.msra.mxu0 %v1028
    %1269 = vmatprep.subr.bf16.mxu0 0
    %1270 = vmatpush1.bf16.msra.mxu0 0
    %1271 = vmatprep.subr.bf16.mxu0 0
    %1272 = vmatpush1.bf16.msra.mxu0 0
    %1273 = vmatprep.subr.bf16.mxu0 0
    %1274 = vmatpush1.bf16.msra.mxu0 0
    %1275 = vmatprep.subr.bf16.mxu0 0
    %1276 = vmatpush1.bf16.msra.mxu0 0
    %1277 = vmatprep.subr.bf16.mxu0 0
    %1278 = vmatpush1.bf16.msra.mxu0 0
    %1279 = vmatprep.subr.bf16.mxu0 0
    %1280 = vmatpush1.bf16.msra.mxu0 0
    %1281 = vmatprep.subr.bf16.mxu0 0
    %1282 = vmatpush1.bf16.msra.mxu0 0
    %1283 = vmatprep.subr.bf16.mxu0 0
    %1284 = vmatpush1.bf16.msra.mxu0 0
    %1285 = vmatprep.mubr.bf16.mxu0 0
    %1286 = vmatmul.mubr.bf16.gmra.mrb[0].mxu0 %v731
    %v1287 = vpop.f32.mrb[0].mxu0
    %v1288 = vadd.f32 %v761, %v1287
    %v1289 = vpop.f32.mrb[0].mxu0
    %v1290 = vadd.f32 %v765, %v1289
    %v1291 = vpop.f32.mrb[0].mxu0
    %v1292 = vadd.f32 %v761, %v1291
    %v1293 = vpop.f32.mrb[0].mxu0
    %v1294 = vadd.f32 %v765, %v1293
    %1295 = vmatprep.mubr.bf16.mxu0 0
    %1296 = vmatmul.mubr.bf16.gmra.mrb[0].mxu0 %v732
    %v1297 = vpop.f32.mrb[0].mxu0
    %v1298 = vadd.f32 %v761, %v1297
    %v1299 = vpop.f32.mrb[0].mxu0
    %v1300 = vadd.f32 %v765, %v1299
    %v1301 = vpop.f32.mrb[0].mxu0
    %v1302 = vadd.f32 %v761, %v1301
    %v1303 = vpop.f32.mrb[0].mxu0
    %v1304 = vadd.f32 %v765, %v1303
    %1305 = vdwg.mxu0
    %v1306 = vmax.f32 %v1129, 0.0
    %v1307 = vmax.f32 %v1131, 0.0
    %v1308 = vmax.f32 %v1182, 0.0
    %v1309 = vmax.f32 %v1184, 0.0
    %v1310 = vmax.f32 %v1235, 0.0
    %v1311 = vmax.f32 %v1237, 0.0
    %v1312 = vmax.f32 %v1288, 0.0
    %v1313 = vmax.f32 %v1290, 0.0
    %v1314 = vmax.f32 %v1133, 0.0
    %v1315 = vmax.f32 %v1135, 0.0
    %v1316 = vmax.f32 %v1186, 0.0
    %v1317 = vmax.f32 %v1188, 0.0
    %v1318 = vmax.f32 %v1239, 0.0
    %v1319 = vmax.f32 %v1241, 0.0
    %v1320 = vmax.f32 %v1292, 0.0
    %v1321 = vmax.f32 %v1294, 0.0
    %v1322 = vmax.f32 %v1139, 0.0
    %v1323 = vmax.f32 %v1141, 0.0
    %v1324 = vmax.f32 %v1192, 0.0
    %v1325 = vmax.f32 %v1194, 0.0
    %v1326 = vmax.f32 %v1245, 0.0
    %v1327 = vmax.f32 %v1247, 0.0
    %v1328 = vmax.f32 %v1298, 0.0
    %v1329 = vmax.f32 %v1300, 0.0
    %v1330 = vmax.f32 %v1143, 0.0
    %v1331 = vmax.f32 %v1145, 0.0
    %v1332 = vmax.f32 %v1196, 0.0
    %v1333 = vmax.f32 %v1198, 0.0
    %v1334 = vmax.f32 %v1249, 0.0
    %v1335 = vmax.f32 %v1251, 0.0
    %v1336 = vmax.f32 %v1302, 0.0
    %v1337 = vmax.f32 %v1304, 0.0
    %v1339 = vlaneseq
    %v1340 = vshrl.u32 %v1339, 7
    %v1341 = vsub.s32 0, %v1340
    %v1342 = vrot.slane %v729, %v1341
    %v1343 = vlaneseq
    %v1344 = vshrl.u32 %v1343, 7
    %v1345 = vsub.s32 1, %v1344
    %v1346 = vrot.slane %v729, %v1345
    %v1347 = vlaneseq
    %v1348 = vshrl.u32 %v1347, 7
    %v1349 = vsub.s32 2, %v1348
    %v1350 = vrot.slane %v729, %v1349
    %v1351 = vlaneseq
    %v1352 = vshrl.u32 %v1351, 7
    %v1353 = vsub.s32 3, %v1352
    %v1354 = vrot.slane %v729, %v1353
    %v1355 = vlaneseq
    %v1356 = vshrl.u32 %v1355, 7
    %v1357 = vsub.s32 4, %v1356
    %v1358 = vrot.slane %v729, %v1357
    %v1359 = vlaneseq
    %v1360 = vshrl.u32 %v1359, 7
    %v1361 = vsub.s32 5, %v1360
    %v1362 = vrot.slane %v729, %v1361
    %v1363 = vlaneseq
    %v1364 = vshrl.u32 %v1363, 7
    %v1365 = vsub.s32 6, %v1364
    %v1366 = vrot.slane %v729, %v1365
    %v1367 = vlaneseq
    %v1368 = vshrl.u32 %v1367, 7
    %v1369 = vsub.s32 7, %v1368
    %v1370 = vrot.slane %v729, %v1369
    %v1379 = vmul.f32 %v1306, %v1342
    %v1380 = vmul.f32 %v1307, %v1346
    %v1381 = vmul.f32 %v1308, %v1350
    %v1382 = vmul.f32 %v1309, %v1354
    %v1383 = vmul.f32 %v1310, %v1358
    %v1384 = vmul.f32 %v1311, %v1362
    %v1385 = vmul.f32 %v1312, %v1366
    %v1386 = vmul.f32 %v1313, %v1370
    %v1387 = vmul.f32 %v1314, %v1342
    %v1388 = vmul.f32 %v1315, %v1346
    %v1389 = vmul.f32 %v1316, %v1350
    %v1390 = vmul.f32 %v1317, %v1354
    %v1391 = vmul.f32 %v1318, %v1358
    %v1392 = vmul.f32 %v1319, %v1362
    %v1393 = vmul.f32 %v1320, %v1366
    %v1394 = vmul.f32 %v1321, %v1370
    %v1395 = vmul.f32 %v1322, %v1342
    %v1396 = vmul.f32 %v1323, %v1346
    %v1397 = vmul.f32 %v1324, %v1350
    %v1398 = vmul.f32 %v1325, %v1354
    %v1399 = vmul.f32 %v1326, %v1358
    %v1400 = vmul.f32 %v1327, %v1362
    %v1401 = vmul.f32 %v1328, %v1366
    %v1402 = vmul.f32 %v1329, %v1370
    %v1403 = vmul.f32 %v1330, %v1342
    %v1404 = vmul.f32 %v1331, %v1346
    %v1405 = vmul.f32 %v1332, %v1350
    %v1406 = vmul.f32 %v1333, %v1354
    %v1407 = vmul.f32 %v1334, %v1358
    %v1408 = vmul.f32 %v1335, %v1362
    %v1409 = vmul.f32 %v1336, %v1366
    %v1410 = vmul.f32 %v1337, %v1370
    %v1412 = vlaneseq
    %v1413 = vshrl.u32 %v1412, 7
    %v1414 = vsub.s32 0, %v1413
    %v1415 = vrot.slane %v730, %v1414
    %v1416 = vlaneseq
    %v1417 = vshrl.u32 %v1416, 7
    %v1418 = vsub.s32 1, %v1417
    %v1419 = vrot.slane %v730, %v1418
    %v1420 = vlaneseq
    %v1421 = vshrl.u32 %v1420, 7
    %v1422 = vsub.s32 2, %v1421
    %v1423 = vrot.slane %v730, %v1422
    %v1424 = vlaneseq
    %v1425 = vshrl.u32 %v1424, 7
    %v1426 = vsub.s32 3, %v1425
    %v1427 = vrot.slane %v730, %v1426
    %v1428 = vlaneseq
    %v1429 = vshrl.u32 %v1428, 7
    %v1430 = vsub.s32 4, %v1429
    %v1431 = vrot.slane %v730, %v1430
    %v1432 = vlaneseq
    %v1433 = vshrl.u32 %v1432, 7
    %v1434 = vsub.s32 5, %v1433
    %v1435 = vrot.slane %v730, %v1434
    %v1436 = vlaneseq
    %v1437 = vshrl.u32 %v1436, 7
    %v1438 = vsub.s32 6, %v1437
    %v1439 = vrot.slane %v730, %v1438
    %v1440 = vlaneseq
    %v1441 = vshrl.u32 %v1440, 7
    %v1442 = vsub.s32 7, %v1441
    %v1443 = vrot.slane %v730, %v1442
    %v1452 = vadd.f32 %v1379, %v1415
    %v1453 = vadd.f32 %v1380, %v1419
    %v1454 = vadd.f32 %v1381, %v1423
    %v1455 = vadd.f32 %v1382, %v1427
    %v1456 = vadd.f32 %v1383, %v1431
    %v1457 = vadd.f32 %v1384, %v1435
    %v1458 = vadd.f32 %v1385, %v1439
    %v1459 = vadd.f32 %v1386, %v1443
    %v1460 = vadd.f32 %v1387, %v1415
    %v1461 = vadd.f32 %v1388, %v1419
    %v1462 = vadd.f32 %v1389, %v1423
    %v1463 = vadd.f32 %v1390, %v1427
    %v1464 = vadd.f32 %v1391, %v1431
    %v1465 = vadd.f32 %v1392, %v1435
    %v1466 = vadd.f32 %v1393, %v1439
    %v1467 = vadd.f32 %v1394, %v1443
    %v1468 = vadd.f32 %v1395, %v1415
    %v1469 = vadd.f32 %v1396, %v1419
    %v1470 = vadd.f32 %v1397, %v1423
    %v1471 = vadd.f32 %v1398, %v1427
    %v1472 = vadd.f32 %v1399, %v1431
    %v1473 = vadd.f32 %v1400, %v1435
    %v1474 = vadd.f32 %v1401, %v1439
    %v1475 = vadd.f32 %v1402, %v1443
    %v1476 = vadd.f32 %v1403, %v1415
    %v1477 = vadd.f32 %v1404, %v1419
    %v1478 = vadd.f32 %v1405, %v1423
    %v1479 = vadd.f32 %v1406, %v1427
    %v1480 = vadd.f32 %v1407, %v1431
    %v1481 = vadd.f32 %v1408, %v1435
    %v1482 = vadd.f32 %v1409, %v1439
    %v1483 = vadd.f32 %v1410, %v1443
    %1484 = vst [vmem:[#allocation19] sm:$0xff] %v1452
    %1485 = vst [vmem:[#allocation19 + $0x8] sm:$0xff] %v1453
    %1486 = vst [vmem:[#allocation19 + $0x10] sm:$0xff] %v1454
    %1487 = vst [vmem:[#allocation19 + $0x18] sm:$0xff] %v1455
    %1488 = vst [vmem:[#allocation19 + $0x20] sm:$0xff] %v1456
    %1489 = vst [vmem:[#allocation19 + $0x28] sm:$0xff] %v1457
    %1490 = vst [vmem:[#allocation19 + $0x30] sm:$0xff] %v1458
    %1491 = vst [vmem:[#allocation19 + $0x38] sm:$0xff] %v1459
    %1492 = vst [vmem:[#allocation19 + $0x40] sm:$0xff] %v1460
    %1493 = vst [vmem:[#allocation19 + $0x48] sm:$0xff] %v1461
    %1494 = vst [vmem:[#allocation19 + $0x50] sm:$0xff] %v1462
    %1495 = vst [vmem:[#allocation19 + $0x58] sm:$0xff] %v1463
    %1496 = vst [vmem:[#allocation19 + $0x60] sm:$0xff] %v1464
    %1497 = vst [vmem:[#allocation19 + $0x68] sm:$0xff] %v1465
    %1498 = vst [vmem:[#allocation19 + $0x70] sm:$0xff] %v1466
    %1499 = vst [vmem:[#allocation19 + $0x78] sm:$0xff] %v1467
    %1500 = vst [vmem:[#allocation19 + $0x80] sm:$0xff] %v1468
    %1501 = vst [vmem:[#allocation19 + $0x88] sm:$0xff] %v1469
    %1502 = vst [vmem:[#allocation19 + $0x90] sm:$0xff] %v1470
    %1503 = vst [vmem:[#allocation19 + $0x98] sm:$0xff] %v1471
    %1504 = vst [vmem:[#allocation19 + $0xa0] sm:$0xff] %v1472
    %1505 = vst [vmem:[#allocation19 + $0xa8] sm:$0xff] %v1473
    %1506 = vst [vmem:[#allocation19 + $0xb0] sm:$0xff] %v1474
    %1507 = vst [vmem:[#allocation19 + $0xb8] sm:$0xff] %v1475
    %1508 = vst [vmem:[#allocation19 + $0xc0] sm:$0xff] %v1476
    %1509 = vst [vmem:[#allocation19 + $0xc8] sm:$0xff] %v1477
    %1510 = vst [vmem:[#allocation19 + $0xd0] sm:$0xff] %v1478
    %1511 = vst [vmem:[#allocation19 + $0xd8] sm:$0xff] %v1479
    %1512 = vst [vmem:[#allocation19 + $0xe0] sm:$0xff] %v1480
    %1513 = vst [vmem:[#allocation19 + $0xe8] sm:$0xff] %v1481
    %1514 = vst [vmem:[#allocation19 + $0xf0] sm:$0xff] %v1482
    %1515 = vst [vmem:[#allocation19 + $0xf8] sm:$0xff] %v1483
    %p1516 = scmp.eq.s32.totalorder 0, 0
    // Predicated region
    $region130: #{tpu_custom_call.1} parent=1 // pred_check
      %p1517 = pneg %p1516
    $region131: #{tpu_custom_call.1} parent=1 // pred_check_branch
      %1519 = sbr.rel (%p1517) target = $region133
    $region132: #{tpu_custom_call.1} parent=1 // pred_region
      %1520 = vst [vmem:[#allocation20] sm:$0xff] -inf
      %1521 = vst [vmem:[#allocation20 + $0x8] sm:$0xff] -inf
      %1522 = vst [vmem:[#allocation20 + $0x10] sm:$0xff] -inf
      %1523 = vst [vmem:[#allocation20 + $0x18] sm:$0xff] -inf
      %1524 = vst [vmem:[#allocation20 + $0x20] sm:$0xff] -inf
      %1525 = vst [vmem:[#allocation20 + $0x28] sm:$0xff] -inf
      %1526 = vst [vmem:[#allocation20 + $0x30] sm:$0xff] -inf
      %1527 = vst [vmem:[#allocation20 + $0x38] sm:$0xff] -inf
    $region133: #{tpu_custom_call.1} parent=1 // pred_fallthru
      _
    %v1528 = vld [vmem:[%s1] sm:$0xff]
    %v1529 = vld [vmem:[%s1 + $0x8] sm:$0xff]
    %v1530 = vld [vmem:[%s1 + $0x10] sm:$0xff]
    %v1531 = vld [vmem:[%s1 + $0x18] sm:$0xff]
    %vm1532 = vcmp.eq.s32.totalorder %v1528, 0
    %vm1533 = vcmp.eq.s32.totalorder %v1529, 0
    %vm1534 = vcmp.eq.s32.totalorder %v1530, 0
    %vm1535 = vcmp.eq.s32.totalorder %v1531, 0
    %v1536 = vsel %vm1532, 1, 0
    %v1537 = vsel %vm1533, 1, 0
    %v1538 = vsel %vm1534, 1, 0
    %v1539 = vsel %vm1535, 1, 0
    %1540 = vset.pattern.permute.xlu0 0
    %1541 = vperm.xlu0 %1540, %v1536
    %v1542 = vpop.permute.xlu0 %1541
    %1543 = vset.pattern.permute.xlu0 0
    %1544 = vperm.xlu0 %1543, %v1537
    %v1545 = vpop.permute.xlu0 %1544
    %1546 = vset.pattern.permute.xlu0 0
    %1547 = vperm.xlu0 %1546, %v1538
    %v1548 = vpop.permute.xlu0 %1547
    %1549 = vset.pattern.permute.xlu0 0
    %1550 = vperm.xlu0 %1549, %v1539
    %v1551 = vpop.permute.xlu0 %1550
    %vm1552 = vcmp.eq.s32.totalorder %v1542, 1
    %vm1553 = vcmp.eq.s32.totalorder %v1545, 1
    %vm1554 = vcmp.eq.s32.totalorder %v1548, 1
    %vm1555 = vcmp.eq.s32.totalorder %v1551, 1
    %v1556 = vsel %vm1552, %v1452, -inf
    %v1557 = vsel %vm1552, %v1453, -inf
    %v1558 = vsel %vm1552, %v1454, -inf
    %v1559 = vsel %vm1552, %v1455, -inf
    %v1560 = vsel %vm1552, %v1456, -inf
    %v1561 = vsel %vm1552, %v1457, -inf
    %v1562 = vsel %vm1552, %v1458, -inf
    %v1563 = vsel %vm1552, %v1459, -inf
    %v1564 = vsel %vm1553, %v1460, -inf
    %v1565 = vsel %vm1553, %v1461, -inf
    %v1566 = vsel %vm1553, %v1462, -inf
    %v1567 = vsel %vm1553, %v1463, -inf
    %v1568 = vsel %vm1553, %v1464, -inf
    %v1569 = vsel %vm1553, %v1465, -inf
    %v1570 = vsel %vm1553, %v1466, -inf
    %v1571 = vsel %vm1553, %v1467, -inf
    %v1572 = vsel %vm1554, %v1468, -inf
    %v1573 = vsel %vm1554, %v1469, -inf
    %v1574 = vsel %vm1554, %v1470, -inf
    %v1575 = vsel %vm1554, %v1471, -inf
    %v1576 = vsel %vm1554, %v1472, -inf
    %v1577 = vsel %vm1554, %v1473, -inf
    %v1578 = vsel %vm1554, %v1474, -inf
    %v1579 = vsel %vm1554, %v1475, -inf
    %v1580 = vsel %vm1555, %v1476, -inf
    %v1581 = vsel %vm1555, %v1477, -inf
    %v1582 = vsel %vm1555, %v1478, -inf
    %v1583 = vsel %vm1555, %v1479, -inf
    %v1584 = vsel %vm1555, %v1480, -inf
    %v1585 = vsel %vm1555, %v1481, -inf
    %v1586 = vsel %vm1555, %v1482, -inf
    %v1587 = vsel %vm1555, %v1483, -inf
    %v1588 = vmax.f32 %v1556, %v1564
    %v1589 = vmax.f32 %v1588, %v1572
    %v1590 = vmax.f32 %v1589, %v1580
    %v1591 = vrot.slane %v1590, 4
    %v1592 = vmax.f32 %v1590, %v1591
    %v1593 = vrot.slane %v1592, 2
    %v1594 = vmax.f32 %v1592, %v1593
    %v1595 = vrot.slane %v1594, 1
    %v1596 = vmax.f32 %v1594, %v1595
    %v1597 = vmax.f32 %v1557, %v1565
    %v1598 = vmax.f32 %v1597, %v1573
    %v1599 = vmax.f32 %v1598, %v1581
    %v1600 = vrot.slane %v1599, 4
    %v1601 = vmax.f32 %v1599, %v1600
    %v1602 = vrot.slane %v1601, 2
    %v1603 = vmax.f32 %v1601, %v1602
    %v1604 = vrot.slane %v1603, 1
    %v1605 = vmax.f32 %v1603, %v1604
    %v1606 = vmax.f32 %v1558, %v1566
    %v1607 = vmax.f32 %v1606, %v1574
    %v1608 = vmax.f32 %v1607, %v1582
    %v1609 = vrot.slane %v1608, 4
    %v1610 = vmax.f32 %v1608, %v1609
    %v1611 = vrot.slane %v1610, 2
    %v1612 = vmax.f32 %v1610, %v1611
    %v1613 = vrot.slane %v1612, 1
    %v1614 = vmax.f32 %v1612, %v1613
    %v1615 = vmax.f32 %v1559, %v1567
    %v1616 = vmax.f32 %v1615, %v1575
    %v1617 = vmax.f32 %v1616, %v1583
    %v1618 = vrot.slane %v1617, 4
    %v1619 = vmax.f32 %v1617, %v1618
    %v1620 = vrot.slane %v1619, 2
    %v1621 = vmax.f32 %v1619, %v1620
    %v1622 = vrot.slane %v1621, 1
    %v1623 = vmax.f32 %v1621, %v1622
    %v1624 = vmax.f32 %v1560, %v1568
    %v1625 = vmax.f32 %v1624, %v1576
    %v1626 = vmax.f32 %v1625, %v1584
    %v1627 = vrot.slane %v1626, 4
    %v1628 = vmax.f32 %v1626, %v1627
    %v1629 = vrot.slane %v1628, 2
    %v1630 = vmax.f32 %v1628, %v1629
    %v1631 = vrot.slane %v1630, 1
    %v1632 = vmax.f32 %v1630, %v1631
    %v1633 = vmax.f32 %v1561, %v1569
    %v1634 = vmax.f32 %v1633, %v1577
    %v1635 = vmax.f32 %v1634, %v1585
    %v1636 = vrot.slane %v1635, 4
    %v1637 = vmax.f32 %v1635, %v1636
    %v1638 = vrot.slane %v1637, 2
    %v1639 = vmax.f32 %v1637, %v1638
    %v1640 = vrot.slane %v1639, 1
    %v1641 = vmax.f32 %v1639, %v1640
    %v1642 = vmax.f32 %v1562, %v1570
    %v1643 = vmax.f32 %v1642, %v1578
    %v1644 = vmax.f32 %v1643, %v1586
    %v1645 = vrot.slane %v1644, 4
    %v1646 = vmax.f32 %v1644, %v1645
    %v1647 = vrot.slane %v1646, 2
    %v1648 = vmax.f32 %v1646, %v1647
    %v1649 = vrot.slane %v1648, 1
    %v1650 = vmax.f32 %v1648, %v1649
    %v1651 = vmax.f32 %v1563, %v1571
    %v1652 = vmax.f32 %v1651, %v1579
    %v1653 = vmax.f32 %v1652, %v1587
    %v1654 = vrot.slane %v1653, 4
    %v1655 = vmax.f32 %v1653, %v1654
    %v1656 = vrot.slane %v1655, 2
    %v1657 = vmax.f32 %v1655, %v1656
    %v1658 = vrot.slane %v1657, 1
    %v1659 = vmax.f32 %v1657, %v1658
    %vm1660 = vcmp.eq.s32.totalorder %v1528, 1
    %vm1661 = vcmp.eq.s32.totalorder %v1529, 1
    %vm1662 = vcmp.eq.s32.totalorder %v1530, 1
    %vm1663 = vcmp.eq.s32.totalorder %v1531, 1
    %v1664 = vsel %vm1660, 1, 0
    %v1665 = vsel %vm1661, 1, 0
    %v1666 = vsel %vm1662, 1, 0
    %v1667 = vsel %vm1663, 1, 0
    %1668 = vset.pattern.permute.xlu0 0
    %1669 = vperm.xlu0 %1668, %v1664
    %v1670 = vpop.permute.xlu0 %1669
    %1671 = vset.pattern.permute.xlu0 0
    %1672 = vperm.xlu0 %1671, %v1665
    %v1673 = vpop.permute.xlu0 %1672
    %1674 = vset.pattern.permute.xlu0 0
    %1675 = vperm.xlu0 %1674, %v1666
    %v1676 = vpop.permute.xlu0 %1675
    %1677 = vset.pattern.permute.xlu0 0
    %1678 = vperm.xlu0 %1677, %v1667
    %v1679 = vpop.permute.xlu0 %1678
    %vm1680 = vcmp.eq.s32.totalorder %v1670, 1
    %vm1681 = vcmp.eq.s32.totalorder %v1673, 1
    %vm1682 = vcmp.eq.s32.totalorder %v1676, 1
    %vm1683 = vcmp.eq.s32.totalorder %v1679, 1
    %v1684 = vsel %vm1680, %v1452, -inf
    %v1685 = vsel %vm1680, %v1453, -inf
    %v1686 = vsel %vm1680, %v1454, -inf
    %v1687 = vsel %vm1680, %v1455, -inf
    %v1688 = vsel %vm1680, %v1456, -inf
    %v1689 = vsel %vm1680, %v1457, -inf
    %v1690 = vsel %vm1680, %v1458, -inf
    %v1691 = vsel %vm1680, %v1459, -inf
    %v1692 = vsel %vm1681, %v1460, -inf
    %v1693 = vsel %vm1681, %v1461, -inf
    %v1694 = vsel %vm1681, %v1462, -inf
    %v1695 = vsel %vm1681, %v1463, -inf
    %v1696 = vsel %vm1681, %v1464, -inf
    %v1697 = vsel %vm1681, %v1465, -inf
    %v1698 = vsel %vm1681, %v1466, -inf
    %v1699 = vsel %vm1681, %v1467, -inf
    %v1700 = vsel %vm1682, %v1468, -inf
    %v1701 = vsel %vm1682, %v1469, -inf
    %v1702 = vsel %vm1682, %v1470, -inf
    %v1703 = vsel %vm1682, %v1471, -inf
    %v1704 = vsel %vm1682, %v1472, -inf
    %v1705 = vsel %vm1682, %v1473, -inf
    %v1706 = vsel %vm1682, %v1474, -inf
    %v1707 = vsel %vm1682, %v1475, -inf
    %v1708 = vsel %vm1683, %v1476, -inf
    %v1709 = vsel %vm1683, %v1477, -inf
    %v1710 = vsel %vm1683, %v1478, -inf
    %v1711 = vsel %vm1683, %v1479, -inf
    %v1712 = vsel %vm1683, %v1480, -inf
    %v1713 = vsel %vm1683, %v1481, -inf
    %v1714 = vsel %vm1683, %v1482, -inf
    %v1715 = vsel %vm1683, %v1483, -inf
    %v1716 = vmax.f32 %v1684, %v1692
    %v1717 = vmax.f32 %v1716, %v1700
    %v1718 = vmax.f32 %v1717, %v1708
    %v1719 = vrot.slane %v1718, 4
    %v1720 = vmax.f32 %v1718, %v1719
    %v1721 = vrot.slane %v1720, 2
    %v1722 = vmax.f32 %v1720, %v1721
    %v1723 = vrot.slane %v1722, 1
    %v1724 = vmax.f32 %v1722, %v1723
    %v1725 = vmax.f32 %v1685, %v1693
    %v1726 = vmax.f32 %v1725, %v1701
    %v1727 = vmax.f32 %v1726, %v1709
    %v1728 = vrot.slane %v1727, 4
    %v1729 = vmax.f32 %v1727, %v1728
    %v1730 = vrot.slane %v1729, 2
    %v1731 = vmax.f32 %v1729, %v1730
    %v1732 = vrot.slane %v1731, 1
    %v1733 = vmax.f32 %v1731, %v1732
    %v1734 = vmax.f32 %v1686, %v1694
    %v1735 = vmax.f32 %v1734, %v1702
    %v1736 = vmax.f32 %v1735, %v1710
    %v1737 = vrot.slane %v1736, 4
    %v1738 = vmax.f32 %v1736, %v1737
    %v1739 = vrot.slane %v1738, 2
    %v1740 = vmax.f32 %v1738, %v1739
    %v1741 = vrot.slane %v1740, 1
    %v1742 = vmax.f32 %v1740, %v1741
    %v1743 = vmax.f32 %v1687, %v1695
    %v1744 = vmax.f32 %v1743, %v1703
    %v1745 = vmax.f32 %v1744, %v1711
    %v1746 = vrot.slane %v1745, 4
    %v1747 = vmax.f32 %v1745, %v1746
    %v1748 = vrot.slane %v1747, 2
    %v1749 = vmax.f32 %v1747, %v1748
    %v1750 = vrot.slane %v1749, 1
    %v1751 = vmax.f32 %v1749, %v1750
    %v1752 = vmax.f32 %v1688, %v1696
    %v1753 = vmax.f32 %v1752, %v1704
    %v1754 = vmax.f32 %v1753, %v1712
    %v1755 = vrot.slane %v1754, 4
    %v1756 = vmax.f32 %v1754, %v1755
    %v1757 = vrot.slane %v1756, 2
    %v1758 = vmax.f32 %v1756, %v1757
    %v1759 = vrot.slane %v1758, 1
    %v1760 = vmax.f32 %v1758, %v1759
    %v1761 = vmax.f32 %v1689, %v1697
    %v1762 = vmax.f32 %v1761, %v1705
    %v1763 = vmax.f32 %v1762, %v1713
    %v1764 = vrot.slane %v1763, 4
    %v1765 = vmax.f32 %v1763, %v1764
    %v1766 = vrot.slane %v1765, 2
    %v1767 = vmax.f32 %v1765, %v1766
    %v1768 = vrot.slane %v1767, 1
    %v1769 = vmax.f32 %v1767, %v1768
    %v1770 = vmax.f32 %v1690, %v1698
    %v1771 = vmax.f32 %v1770, %v1706
    %v1772 = vmax.f32 %v1771, %v1714
    %v1773 = vrot.slane %v1772, 4
    %v1774 = vmax.f32 %v1772, %v1773
    %v1775 = vrot.slane %v1774, 2
    %v1776 = vmax.f32 %v1774, %v1775
    %v1777 = vrot.slane %v1776, 1
    %v1778 = vmax.f32 %v1776, %v1777
    %v1779 = vmax.f32 %v1691, %v1699
    %v1780 = vmax.f32 %v1779, %v1707
    %v1781 = vmax.f32 %v1780, %v1715
    %v1782 = vrot.slane %v1781, 4
    %v1783 = vmax.f32 %v1781, %v1782
    %v1784 = vrot.slane %v1783, 2
    %v1785 = vmax.f32 %v1783, %v1784
    %v1786 = vrot.slane %v1785, 1
    %v1787 = vmax.f32 %v1785, %v1786
    %vm1788 = vcmp.eq.s32.totalorder %v1528, 2
    %vm1789 = vcmp.eq.s32.totalorder %v1529, 2
    %vm1790 = vcmp.eq.s32.totalorder %v1530, 2
    %vm1791 = vcmp.eq.s32.totalorder %v1531, 2
    %v1792 = vsel %vm1788, 1, 0
    %v1793 = vsel %vm1789, 1, 0
    %v1794 = vsel %vm1790, 1, 0
    %v1795 = vsel %vm1791, 1, 0
    %1796 = vset.pattern.permute.xlu0 0
    %1797 = vperm.xlu0 %1796, %v1792
    %v1798 = vpop.permute.xlu0 %1797
    %1799 = vset.pattern.permute.xlu0 0
    %1800 = vperm.xlu0 %1799, %v1793
    %v1801 = vpop.permute.xlu0 %1800
    %1802 = vset.pattern.permute.xlu0 0
    %1803 = vperm.xlu0 %1802, %v1794
    %v1804 = vpop.permute.xlu0 %1803
    %1805 = vset.pattern.permute.xlu0 0
    %1806 = vperm.xlu0 %1805, %v1795
    %v1807 = vpop.permute.xlu0 %1806
    %vm1808 = vcmp.eq.s32.totalorder %v1798, 1
    %vm1809 = vcmp.eq.s32.totalorder %v1801, 1
    %vm1810 = vcmp.eq.s32.totalorder %v1804, 1
    %vm1811 = vcmp.eq.s32.totalorder %v1807, 1
    %v1812 = vsel %vm1808, %v1452, -inf
    %v1813 = vsel %vm1808, %v1453, -inf
    %v1814 = vsel %vm1808, %v1454, -inf
    %v1815 = vsel %vm1808, %v1455, -inf
    %v1816 = vsel %vm1808, %v1456, -inf
    %v1817 = vsel %vm1808, %v1457, -inf
    %v1818 = vsel %vm1808, %v1458, -inf
    %v1819 = vsel %vm1808, %v1459, -inf
    %v1820 = vsel %vm1809, %v1460, -inf
    %v1821 = vsel %vm1809, %v1461, -inf
    %v1822 = vsel %vm1809, %v1462, -inf
    %v1823 = vsel %vm1809, %v1463, -inf
    %v1824 = vsel %vm1809, %v1464, -inf
    %v1825 = vsel %vm1809, %v1465, -inf
    %v1826 = vsel %vm1809, %v1466, -inf
    %v1827 = vsel %vm1809, %v1467, -inf
    %v1828 = vsel %vm1810, %v1468, -inf
    %v1829 = vsel %vm1810, %v1469, -inf
    %v1830 = vsel %vm1810, %v1470, -inf
    %v1831 = vsel %vm1810, %v1471, -inf
    %v1832 = vsel %vm1810, %v1472, -inf
    %v1833 = vsel %vm1810, %v1473, -inf
    %v1834 = vsel %vm1810, %v1474, -inf
    %v1835 = vsel %vm1810, %v1475, -inf
    %v1836 = vsel %vm1811, %v1476, -inf
    %v1837 = vsel %vm1811, %v1477, -inf
    %v1838 = vsel %vm1811, %v1478, -inf
    %v1839 = vsel %vm1811, %v1479, -inf
    %v1840 = vsel %vm1811, %v1480, -inf
    %v1841 = vsel %vm1811, %v1481, -inf
    %v1842 = vsel %vm1811, %v1482, -inf
    %v1843 = vsel %vm1811, %v1483, -inf
    %v1844 = vmax.f32 %v1812, %v1820
    %v1845 = vmax.f32 %v1844, %v1828
    %v1846 = vmax.f32 %v1845, %v1836
    %v1847 = vrot.slane %v1846, 4
    %v1848 = vmax.f32 %v1846, %v1847
    %v1849 = vrot.slane %v1848, 2
    %v1850 = vmax.f32 %v1848, %v1849
    %v1851 = vrot.slane %v1850, 1
    %v1852 = vmax.f32 %v1850, %v1851
    %v1853 = vmax.f32 %v1813, %v1821
    %v1854 = vmax.f32 %v1853, %v1829
    %v1855 = vmax.f32 %v1854, %v1837
    %v1856 = vrot.slane %v1855, 4
    %v1857 = vmax.f32 %v1855, %v1856
    %v1858 = vrot.slane %v1857, 2
    %v1859 = vmax.f32 %v1857, %v1858
    %v1860 = vrot.slane %v1859, 1
    %v1861 = vmax.f32 %v1859, %v1860
    %v1862 = vmax.f32 %v1814, %v1822
    %v1863 = vmax.f32 %v1862, %v1830
    %v1864 = vmax.f32 %v1863, %v1838
    %v1865 = vrot.slane %v1864, 4
    %v1866 = vmax.f32 %v1864, %v1865
    %v1867 = vrot.slane %v1866, 2
    %v1868 = vmax.f32 %v1866, %v1867
    %v1869 = vrot.slane %v1868, 1
    %v1870 = vmax.f32 %v1868, %v1869
    %v1871 = vmax.f32 %v1815, %v1823
    %v1872 = vmax.f32 %v1871, %v1831
    %v1873 = vmax.f32 %v1872, %v1839
    %v1874 = vrot.slane %v1873, 4
    %v1875 = vmax.f32 %v1873, %v1874
    %v1876 = vrot.slane %v1875, 2
    %v1877 = vmax.f32 %v1875, %v1876
    %v1878 = vrot.slane %v1877, 1
    %v1879 = vmax.f32 %v1877, %v1878
    %v1880 = vmax.f32 %v1816, %v1824
    %v1881 = vmax.f32 %v1880, %v1832
    %v1882 = vmax.f32 %v1881, %v1840
    %v1883 = vrot.slane %v1882, 4
    %v1884 = vmax.f32 %v1882, %v1883
    %v1885 = vrot.slane %v1884, 2
    %v1886 = vmax.f32 %v1884, %v1885
    %v1887 = vrot.slane %v1886, 1
    %v1888 = vmax.f32 %v1886, %v1887
    %v1889 = vmax.f32 %v1817, %v1825
    %v1890 = vmax.f32 %v1889, %v1833
    %v1891 = vmax.f32 %v1890, %v1841
    %v1892 = vrot.slane %v1891, 4
    %v1893 = vmax.f32 %v1891, %v1892
    %v1894 = vrot.slane %v1893, 2
    %v1895 = vmax.f32 %v1893, %v1894
    %v1896 = vrot.slane %v1895, 1
    %v1897 = vmax.f32 %v1895, %v1896
    %v1898 = vmax.f32 %v1818, %v1826
    %v1899 = vmax.f32 %v1898, %v1834
    %v1900 = vmax.f32 %v1899, %v1842
    %v1901 = vrot.slane %v1900, 4
    %v1902 = vmax.f32 %v1900, %v1901
    %v1903 = vrot.slane %v1902, 2
    %v1904 = vmax.f32 %v1902, %v1903
    %v1905 = vrot.slane %v1904, 1
    %v1906 = vmax.f32 %v1904, %v1905
    %v1907 = vmax.f32 %v1819, %v1827
    %v1908 = vmax.f32 %v1907, %v1835
    %v1909 = vmax.f32 %v1908, %v1843
    %v1910 = vrot.slane %v1909, 4
    %v1911 = vmax.f32 %v1909, %v1910
    %v1912 = vrot.slane %v1911, 2
    %v1913 = vmax.f32 %v1911, %v1912
    %v1914 = vrot.slane %v1913, 1
    %v1915 = vmax.f32 %v1913, %v1914
    %vm1916 = vcmp.eq.s32.totalorder %v1528, 3
    %vm1917 = vcmp.eq.s32.totalorder %v1529, 3
    %vm1918 = vcmp.eq.s32.totalorder %v1530, 3
    %vm1919 = vcmp.eq.s32.totalorder %v1531, 3
    %v1920 = vsel %vm1916, 1, 0
    %v1921 = vsel %vm1917, 1, 0
    %v1922 = vsel %vm1918, 1, 0
    %v1923 = vsel %vm1919, 1, 0
    %1924 = vset.pattern.permute.xlu0 0
    %1925 = vperm.xlu0 %1924, %v1920
    %v1926 = vpop.permute.xlu0 %1925
    %1927 = vset.pattern.permute.xlu0 0
    %1928 = vperm.xlu0 %1927, %v1921
    %v1929 = vpop.permute.xlu0 %1928
    %1930 = vset.pattern.permute.xlu0 0
    %1931 = vperm.xlu0 %1930, %v1922
    %v1932 = vpop.permute.xlu0 %1931
    %1933 = vset.pattern.permute.xlu0 0
    %1934 = vperm.xlu0 %1933, %v1923
    %v1935 = vpop.permute.xlu0 %1934
    %vm1936 = vcmp.eq.s32.totalorder %v1926, 1
    %vm1937 = vcmp.eq.s32.totalorder %v1929, 1
    %vm1938 = vcmp.eq.s32.totalorder %v1932, 1
    %vm1939 = vcmp.eq.s32.totalorder %v1935, 1
    %v1940 = vsel %vm1936, %v1452, -inf
    %v1941 = vsel %vm1936, %v1453, -inf
    %v1942 = vsel %vm1936, %v1454, -inf
    %v1943 = vsel %vm1936, %v1455, -inf
    %v1944 = vsel %vm1936, %v1456, -inf
    %v1945 = vsel %vm1936, %v1457, -inf
    %v1946 = vsel %vm1936, %v1458, -inf
    %v1947 = vsel %vm1936, %v1459, -inf
    %v1948 = vsel %vm1937, %v1460, -inf
    %v1949 = vsel %vm1937, %v1461, -inf
    %v1950 = vsel %vm1937, %v1462, -inf
    %v1951 = vsel %vm1937, %v1463, -inf
    %v1952 = vsel %vm1937, %v1464, -inf
    %v1953 = vsel %vm1937, %v1465, -inf
    %v1954 = vsel %vm1937, %v1466, -inf
    %v1955 = vsel %vm1937, %v1467, -inf
    %v1956 = vsel %vm1938, %v1468, -inf
    %v1957 = vsel %vm1938, %v1469, -inf
    %v1958 = vsel %vm1938, %v1470, -inf
    %v1959 = vsel %vm1938, %v1471, -inf
    %v1960 = vsel %vm1938, %v1472, -inf
    %v1961 = vsel %vm1938, %v1473, -inf
    %v1962 = vsel %vm1938, %v1474, -inf
    %v1963 = vsel %vm1938, %v1475, -inf
    %v1964 = vsel %vm1939, %v1476, -inf
    %v1965 = vsel %vm1939, %v1477, -inf
    %v1966 = vsel %vm1939, %v1478, -inf
    %v1967 = vsel %vm1939, %v1479, -inf
    %v1968 = vsel %vm1939, %v1480, -inf
    %v1969 = vsel %vm1939, %v1481, -inf
    %v1970 = vsel %vm1939, %v1482, -inf
    %v1971 = vsel %vm1939, %v1483, -inf
    %v1972 = vmax.f32 %v1940, %v1948
    %v1973 = vmax.f32 %v1972, %v1956
    %v1974 = vmax.f32 %v1973, %v1964
    %v1975 = vrot.slane %v1974, 4
    %v1976 = vmax.f32 %v1974, %v1975
    %v1977 = vrot.slane %v1976, 2
    %v1978 = vmax.f32 %v1976, %v1977
    %v1979 = vrot.slane %v1978, 1
    %v1980 = vmax.f32 %v1978, %v1979
    %v1981 = vmax.f32 %v1941, %v1949
    %v1982 = vmax.f32 %v1981, %v1957
    %v1983 = vmax.f32 %v1982, %v1965
    %v1984 = vrot.slane %v1983, 4
    %v1985 = vmax.f32 %v1983, %v1984
    %v1986 = vrot.slane %v1985, 2
    %v1987 = vmax.f32 %v1985, %v1986
    %v1988 = vrot.slane %v1987, 1
    %v1989 = vmax.f32 %v1987, %v1988
    %v1990 = vmax.f32 %v1942, %v1950
    %v1991 = vmax.f32 %v1990, %v1958
    %v1992 = vmax.f32 %v1991, %v1966
    %v1993 = vrot.slane %v1992, 4
    %v1994 = vmax.f32 %v1992, %v1993
    %v1995 = vrot.slane %v1994, 2
    %v1996 = vmax.f32 %v1994, %v1995
    %v1997 = vrot.slane %v1996, 1
    %v1998 = vmax.f32 %v1996, %v1997
    %v1999 = vmax.f32 %v1943, %v1951
    %v2000 = vmax.f32 %v1999, %v1959
    %v2001 = vmax.f32 %v2000, %v1967
    %v2002 = vrot.slane %v2001, 4
    %v2003 = vmax.f32 %v2001, %v2002
    %v2004 = vrot.slane %v2003, 2
    %v2005 = vmax.f32 %v2003, %v2004
    %v2006 = vrot.slane %v2005, 1
    %v2007 = vmax.f32 %v2005, %v2006
    %v2008 = vmax.f32 %v1944, %v1952
    %v2009 = vmax.f32 %v2008, %v1960
    %v2010 = vmax.f32 %v2009, %v1968
    %v2011 = vrot.slane %v2010, 4
    %v2012 = vmax.f32 %v2010, %v2011
    %v2013 = vrot.slane %v2012, 2
    %v2014 = vmax.f32 %v2012, %v2013
    %v2015 = vrot.slane %v2014, 1
    %v2016 = vmax.f32 %v2014, %v2015
    %v2017 = vmax.f32 %v1945, %v1953
    %v2018 = vmax.f32 %v2017, %v1961
    %v2019 = vmax.f32 %v2018, %v1969
    %v2020 = vrot.slane %v2019, 4
    %v2021 = vmax.f32 %v2019, %v2020
    %v2022 = vrot.slane %v2021, 2
    %v2023 = vmax.f32 %v2021, %v2022
    %v2024 = vrot.slane %v2023, 1
    %v2025 = vmax.f32 %v2023, %v2024
    %v2026 = vmax.f32 %v1946, %v1954
    %v2027 = vmax.f32 %v2026, %v1962
    %v2028 = vmax.f32 %v2027, %v1970
    %v2029 = vrot.slane %v2028, 4
    %v2030 = vmax.f32 %v2028, %v2029
    %v2031 = vrot.slane %v2030, 2
    %v2032 = vmax.f32 %v2030, %v2031
    %v2033 = vrot.slane %v2032, 1
    %v2034 = vmax.f32 %v2032, %v2033
    %v2035 = vmax.f32 %v1947, %v1955
    %v2036 = vmax.f32 %v2035, %v1963
    %v2037 = vmax.f32 %v2036, %v1971
    %v2038 = vrot.slane %v2037, 4
    %v2039 = vmax.f32 %v2037, %v2038
    %v2040 = vrot.slane %v2039, 2
    %v2041 = vmax.f32 %v2039, %v2040
    %v2042 = vrot.slane %v2041, 1
    %v2043 = vmax.f32 %v2041, %v2042
    %vm2044 = vcmp.eq.s32.totalorder %v1528, 4
    %vm2045 = vcmp.eq.s32.totalorder %v1529, 4
    %vm2046 = vcmp.eq.s32.totalorder %v1530, 4
    %vm2047 = vcmp.eq.s32.totalorder %v1531, 4
    %v2048 = vsel %vm2044, 1, 0
    %v2049 = vsel %vm2045, 1, 0
    %v2050 = vsel %vm2046, 1, 0
    %v2051 = vsel %vm2047, 1, 0
    %2052 = vset.pattern.permute.xlu0 0
    %2053 = vperm.xlu0 %2052, %v2048
    %v2054 = vpop.permute.xlu0 %2053
    %2055 = vset.pattern.permute.xlu0 0
    %2056 = vperm.xlu0 %2055, %v2049
    %v2057 = vpop.permute.xlu0 %2056
    %2058 = vset.pattern.permute.xlu0 0
    %2059 = vperm.xlu0 %2058, %v2050
    %v2060 = vpop.permute.xlu0 %2059
    %2061 = vset.pattern.permute.xlu0 0
    %2062 = vperm.xlu0 %2061, %v2051
    %v2063 = vpop.permute.xlu0 %2062
    %vm2064 = vcmp.eq.s32.totalorder %v2054, 1
    %vm2065 = vcmp.eq.s32.totalorder %v2057, 1
    %vm2066 = vcmp.eq.s32.totalorder %v2060, 1
    %vm2067 = vcmp.eq.s32.totalorder %v2063, 1
    %v2068 = vsel %vm2064, %v1452, -inf
    %v2069 = vsel %vm2064, %v1453, -inf
    %v2070 = vsel %vm2064, %v1454, -inf
    %v2071 = vsel %vm2064, %v1455, -inf
    %v2072 = vsel %vm2064, %v1456, -inf
    %v2073 = vsel %vm2064, %v1457, -inf
    %v2074 = vsel %vm2064, %v1458, -inf
    %v2075 = vsel %vm2064, %v1459, -inf
    %v2076 = vsel %vm2065, %v1460, -inf
    %v2077 = vsel %vm2065, %v1461, -inf
    %v2078 = vsel %vm2065, %v1462, -inf
    %v2079 = vsel %vm2065, %v1463, -inf
    %v2080 = vsel %vm2065, %v1464, -inf
    %v2081 = vsel %vm2065, %v1465, -inf
    %v2082 = vsel %vm2065, %v1466, -inf
    %v2083 = vsel %vm2065, %v1467, -inf
    %v2084 = vsel %vm2066, %v1468, -inf
    %v2085 = vsel %vm2066, %v1469, -inf
    %v2086 = vsel %vm2066, %v1470, -inf
    %v2087 = vsel %vm2066, %v1471, -inf
    %v2088 = vsel %vm2066, %v1472, -inf
    %v2089 = vsel %vm2066, %v1473, -inf
    %v2090 = vsel %vm2066, %v1474, -inf
    %v2091 = vsel %vm2066, %v1475, -inf
    %v2092 = vsel %vm2067, %v1476, -inf
    %v2093 = vsel %vm2067, %v1477, -inf
    %v2094 = vsel %vm2067, %v1478, -inf
    %v2095 = vsel %vm2067, %v1479, -inf
    %v2096 = vsel %vm2067, %v1480, -inf
    %v2097 = vsel %vm2067, %v1481, -inf
    %v2098 = vsel %vm2067, %v1482, -inf
    %v2099 = vsel %vm2067, %v1483, -inf
    %v2100 = vmax.f32 %v2068, %v2076
    %v2101 = vmax.f32 %v2100, %v2084
    %v2102 = vmax.f32 %v2101, %v2092
    %v2103 = vrot.slane %v2102, 4
    %v2104 = vmax.f32 %v2102, %v2103
    %v2105 = vrot.slane %v2104, 2
    %v2106 = vmax.f32 %v2104, %v2105
    %v2107 = vrot.slane %v2106, 1
    %v2108 = vmax.f32 %v2106, %v2107
    %v2109 = vmax.f32 %v2069, %v2077
    %v2110 = vmax.f32 %v2109, %v2085
    %v2111 = vmax.f32 %v2110, %v2093
    %v2112 = vrot.slane %v2111, 4
    %v2113 = vmax.f32 %v2111, %v2112
    %v2114 = vrot.slane %v2113, 2
    %v2115 = vmax.f32 %v2113, %v2114
    %v2116 = vrot.slane %v2115, 1
    %v2117 = vmax.f32 %v2115, %v2116
    %v2118 = vmax.f32 %v2070, %v2078
    %v2119 = vmax.f32 %v2118, %v2086
    %v2120 = vmax.f32 %v2119, %v2094
    %v2121 = vrot.slane %v2120, 4
    %v2122 = vmax.f32 %v2120, %v2121
    %v2123 = vrot.slane %v2122, 2
    %v2124 = vmax.f32 %v2122, %v2123
    %v2125 = vrot.slane %v2124, 1
    %v2126 = vmax.f32 %v2124, %v2125
    %v2127 = vmax.f32 %v2071, %v2079
    %v2128 = vmax.f32 %v2127, %v2087
    %v2129 = vmax.f32 %v2128, %v2095
    %v2130 = vrot.slane %v2129, 4
    %v2131 = vmax.f32 %v2129, %v2130
    %v2132 = vrot.slane %v2131, 2
    %v2133 = vmax.f32 %v2131, %v2132
    %v2134 = vrot.slane %v2133, 1
    %v2135 = vmax.f32 %v2133, %v2134
    %v2136 = vmax.f32 %v2072, %v2080
    %v2137 = vmax.f32 %v2136, %v2088
    %v2138 = vmax.f32 %v2137, %v2096
    %v2139 = vrot.slane %v2138, 4
    %v2140 = vmax.f32 %v2138, %v2139
    %v2141 = vrot.slane %v2140, 2
    %v2142 = vmax.f32 %v2140, %v2141
    %v2143 = vrot.slane %v2142, 1
    %v2144 = vmax.f32 %v2142, %v2143
    %v2145 = vmax.f32 %v2073, %v2081
    %v2146 = vmax.f32 %v2145, %v2089
    %v2147 = vmax.f32 %v2146, %v2097
    %v2148 = vrot.slane %v2147, 4
    %v2149 = vmax.f32 %v2147, %v2148
    %v2150 = vrot.slane %v2149, 2
    %v2151 = vmax.f32 %v2149, %v2150
    %v2152 = vrot.slane %v2151, 1
    %v2153 = vmax.f32 %v2151, %v2152
    %v2154 = vmax.f32 %v2074, %v2082
    %v2155 = vmax.f32 %v2154, %v2090
    %v2156 = vmax.f32 %v2155, %v2098
    %v2157 = vrot.slane %v2156, 4
    %v2158 = vmax.f32 %v2156, %v2157
    %v2159 = vrot.slane %v2158, 2
    %v2160 = vmax.f32 %v2158, %v2159
    %v2161 = vrot.slane %v2160, 1
    %v2162 = vmax.f32 %v2160, %v2161
    %v2163 = vmax.f32 %v2075, %v2083
    %v2164 = vmax.f32 %v2163, %v2091
    %v2165 = vmax.f32 %v2164, %v2099
    %v2166 = vrot.slane %v2165, 4
    %v2167 = vmax.f32 %v2165, %v2166
    %v2168 = vrot.slane %v2167, 2
    %v2169 = vmax.f32 %v2167, %v2168
    %v2170 = vrot.slane %v2169, 1
    %v2171 = vmax.f32 %v2169, %v2170
    %vm2172 = vcmp.eq.s32.totalorder %v1528, 5
    %vm2173 = vcmp.eq.s32.totalorder %v1529, 5
    %vm2174 = vcmp.eq.s32.totalorder %v1530, 5
    %vm2175 = vcmp.eq.s32.totalorder %v1531, 5
    %v2176 = vsel %vm2172, 1, 0
    %v2177 = vsel %vm2173, 1, 0
    %v2178 = vsel %vm2174, 1, 0
    %v2179 = vsel %vm2175, 1, 0
    %2180 = vset.pattern.permute.xlu0 0
    %2181 = vperm.xlu0 %2180, %v2176
    %v2182 = vpop.permute.xlu0 %2181
    %2183 = vset.pattern.permute.xlu0 0
    %2184 = vperm.xlu0 %2183, %v2177
    %v2185 = vpop.permute.xlu0 %2184
    %2186 = vset.pattern.permute.xlu0 0
    %2187 = vperm.xlu0 %2186, %v2178
    %v2188 = vpop.permute.xlu0 %2187
    %2189 = vset.pattern.permute.xlu0 0
    %2190 = vperm.xlu0 %2189, %v2179
    %v2191 = vpop.permute.xlu0 %2190
    %vm2192 = vcmp.eq.s32.totalorder %v2182, 1
    %vm2193 = vcmp.eq.s32.totalorder %v2185, 1
    %vm2194 = vcmp.eq.s32.totalorder %v2188, 1
    %vm2195 = vcmp.eq.s32.totalorder %v2191, 1
    %v2196 = vsel %vm2192, %v1452, -inf
    %v2197 = vsel %vm2192, %v1453, -inf
    %v2198 = vsel %vm2192, %v1454, -inf
    %v2199 = vsel %vm2192, %v1455, -inf
    %v2200 = vsel %vm2192, %v1456, -inf
    %v2201 = vsel %vm2192, %v1457, -inf
    %v2202 = vsel %vm2192, %v1458, -inf
    %v2203 = vsel %vm2192, %v1459, -inf
    %v2204 = vsel %vm2193, %v1460, -inf
    %v2205 = vsel %vm2193, %v1461, -inf
    %v2206 = vsel %vm2193, %v1462, -inf
    %v2207 = vsel %vm2193, %v1463, -inf
    %v2208 = vsel %vm2193, %v1464, -inf
    %v2209 = vsel %vm2193, %v1465, -inf
    %v2210 = vsel %vm2193, %v1466, -inf
    %v2211 = vsel %vm2193, %v1467, -inf
    %v2212 = vsel %vm2194, %v1468, -inf
    %v2213 = vsel %vm2194, %v1469, -inf
    %v2214 = vsel %vm2194, %v1470, -inf
    %v2215 = vsel %vm2194, %v1471, -inf
    %v2216 = vsel %vm2194, %v1472, -inf
    %v2217 = vsel %vm2194, %v1473, -inf
    %v2218 = vsel %vm2194, %v1474, -inf
    %v2219 = vsel %vm2194, %v1475, -inf
    %v2220 = vsel %vm2195, %v1476, -inf
    %v2221 = vsel %vm2195, %v1477, -inf
    %v2222 = vsel %vm2195, %v1478, -inf
    %v2223 = vsel %vm2195, %v1479, -inf
    %v2224 = vsel %vm2195, %v1480, -inf
    %v2225 = vsel %vm2195, %v1481, -inf
    %v2226 = vsel %vm2195, %v1482, -inf
    %v2227 = vsel %vm2195, %v1483, -inf
    %v2228 = vmax.f32 %v2196, %v2204
    %v2229 = vmax.f32 %v2228, %v2212
    %v2230 = vmax.f32 %v2229, %v2220
    %v2231 = vrot.slane %v2230, 4
    %v2232 = vmax.f32 %v2230, %v2231
    %v2233 = vrot.slane %v2232, 2
    %v2234 = vmax.f32 %v2232, %v2233
    %v2235 = vrot.slane %v2234, 1
    %v2236 = vmax.f32 %v2234, %v2235
    %v2237 = vmax.f32 %v2197, %v2205
    %v2238 = vmax.f32 %v2237, %v2213
    %v2239 = vmax.f32 %v2238, %v2221
    %v2240 = vrot.slane %v2239, 4
    %v2241 = vmax.f32 %v2239, %v2240
    %v2242 = vrot.slane %v2241, 2
    %v2243 = vmax.f32 %v2241, %v2242
    %v2244 = vrot.slane %v2243, 1
    %v2245 = vmax.f32 %v2243, %v2244
    %v2246 = vmax.f32 %v2198, %v2206
    %v2247 = vmax.f32 %v2246, %v2214
    %v2248 = vmax.f32 %v2247, %v2222
    %v2249 = vrot.slane %v2248, 4
    %v2250 = vmax.f32 %v2248, %v2249
    %v2251 = vrot.slane %v2250, 2
    %v2252 = vmax.f32 %v2250, %v2251
    %v2253 = vrot.slane %v2252, 1
    %v2254 = vmax.f32 %v2252, %v2253
    %v2255 = vmax.f32 %v2199, %v2207
    %v2256 = vmax.f32 %v2255, %v2215
    %v2257 = vmax.f32 %v2256, %v2223
    %v2258 = vrot.slane %v2257, 4
    %v2259 = vmax.f32 %v2257, %v2258
    %v2260 = vrot.slane %v2259, 2
    %v2261 = vmax.f32 %v2259, %v2260
    %v2262 = vrot.slane %v2261, 1
    %v2263 = vmax.f32 %v2261, %v2262
    %v2264 = vmax.f32 %v2200, %v2208
    %v2265 = vmax.f32 %v2264, %v2216
    %v2266 = vmax.f32 %v2265, %v2224
    %v2267 = vrot.slane %v2266, 4
    %v2268 = vmax.f32 %v2266, %v2267
    %v2269 = vrot.slane %v2268, 2
    %v2270 = vmax.f32 %v2268, %v2269
    %v2271 = vrot.slane %v2270, 1
    %v2272 = vmax.f32 %v2270, %v2271
    %v2273 = vmax.f32 %v2201, %v2209
    %v2274 = vmax.f32 %v2273, %v2217
    %v2275 = vmax.f32 %v2274, %v2225
    %v2276 = vrot.slane %v2275, 4
    %v2277 = vmax.f32 %v2275, %v2276
    %v2278 = vrot.slane %v2277, 2
    %v2279 = vmax.f32 %v2277, %v2278
    %v2280 = vrot.slane %v2279, 1
    %v2281 = vmax.f32 %v2279, %v2280
    %v2282 = vmax.f32 %v2202, %v2210
    %v2283 = vmax.f32 %v2282, %v2218
    %v2284 = vmax.f32 %v2283, %v2226
    %v2285 = vrot.slane %v2284, 4
    %v2286 = vmax.f32 %v2284, %v2285
    %v2287 = vrot.slane %v2286, 2
    %v2288 = vmax.f32 %v2286, %v2287
    %v2289 = vrot.slane %v2288, 1
    %v2290 = vmax.f32 %v2288, %v2289
    %v2291 = vmax.f32 %v2203, %v2211
    %v2292 = vmax.f32 %v2291, %v2219
    %v2293 = vmax.f32 %v2292, %v2227
    %v2294 = vrot.slane %v2293, 4
    %v2295 = vmax.f32 %v2293, %v2294
    %v2296 = vrot.slane %v2295, 2
    %v2297 = vmax.f32 %v2295, %v2296
    %v2298 = vrot.slane %v2297, 1
    %v2299 = vmax.f32 %v2297, %v2298
    %vm2300 = vcmp.eq.s32.totalorder %v1528, 6
    %vm2301 = vcmp.eq.s32.totalorder %v1529, 6
    %vm2302 = vcmp.eq.s32.totalorder %v1530, 6
    %vm2303 = vcmp.eq.s32.totalorder %v1531, 6
    %v2304 = vsel %vm2300, 1, 0
    %v2305 = vsel %vm2301, 1, 0
    %v2306 = vsel %vm2302, 1, 0
    %v2307 = vsel %vm2303, 1, 0
    %2308 = vset.pattern.permute.xlu0 0
    %2309 = vperm.xlu0 %2308, %v2304
    %v2310 = vpop.permute.xlu0 %2309
    %2311 = vset.pattern.permute.xlu0 0
    %2312 = vperm.xlu0 %2311, %v2305
    %v2313 = vpop.permute.xlu0 %2312
    %2314 = vset.pattern.permute.xlu0 0
    %2315 = vperm.xlu0 %2314, %v2306
    %v2316 = vpop.permute.xlu0 %2315
    %2317 = vset.pattern.permute.xlu0 0
    %2318 = vperm.xlu0 %2317, %v2307
    %v2319 = vpop.permute.xlu0 %2318
    %vm2320 = vcmp.eq.s32.totalorder %v2310, 1
    %vm2321 = vcmp.eq.s32.totalorder %v2313, 1
    %vm2322 = vcmp.eq.s32.totalorder %v2316, 1
    %vm2323 = vcmp.eq.s32.totalorder %v2319, 1
    %v2324 = vsel %vm2320, %v1452, -inf
    %v2325 = vsel %vm2320, %v1453, -inf
    %v2326 = vsel %vm2320, %v1454, -inf
    %v2327 = vsel %vm2320, %v1455, -inf
    %v2328 = vsel %vm2320, %v1456, -inf
    %v2329 = vsel %vm2320, %v1457, -inf
    %v2330 = vsel %vm2320, %v1458, -inf
    %v2331 = vsel %vm2320, %v1459, -inf
    %v2332 = vsel %vm2321, %v1460, -inf
    %v2333 = vsel %vm2321, %v1461, -inf
    %v2334 = vsel %vm2321, %v1462, -inf
    %v2335 = vsel %vm2321, %v1463, -inf
    %v2336 = vsel %vm2321, %v1464, -inf
    %v2337 = vsel %vm2321, %v1465, -inf
    %v2338 = vsel %vm2321, %v1466, -inf
    %v2339 = vsel %vm2321, %v1467, -inf
    %v2340 = vsel %vm2322, %v1468, -inf
    %v2341 = vsel %vm2322, %v1469, -inf
    %v2342 = vsel %vm2322, %v1470, -inf
    %v2343 = vsel %vm2322, %v1471, -inf
    %v2344 = vsel %vm2322, %v1472, -inf
    %v2345 = vsel %vm2322, %v1473, -inf
    %v2346 = vsel %vm2322, %v1474, -inf
    %v2347 = vsel %vm2322, %v1475, -inf
    %v2348 = vsel %vm2323, %v1476, -inf
    %v2349 = vsel %vm2323, %v1477, -inf
    %v2350 = vsel %vm2323, %v1478, -inf
    %v2351 = vsel %vm2323, %v1479, -inf
    %v2352 = vsel %vm2323, %v1480, -inf
    %v2353 = vsel %vm2323, %v1481, -inf
    %v2354 = vsel %vm2323, %v1482, -inf
    %v2355 = vsel %vm2323, %v1483, -inf
    %v2356 = vmax.f32 %v2324, %v2332
    %v2357 = vmax.f32 %v2356, %v2340
    %v2358 = vmax.f32 %v2357, %v2348
    %v2359 = vrot.slane %v2358, 4
    %v2360 = vmax.f32 %v2358, %v2359
    %v2361 = vrot.slane %v2360, 2
    %v2362 = vmax.f32 %v2360, %v2361
    %v2363 = vrot.slane %v2362, 1
    %v2364 = vmax.f32 %v2362, %v2363
    %v2365 = vmax.f32 %v2325, %v2333
    %v2366 = vmax.f32 %v2365, %v2341
    %v2367 = vmax.f32 %v2366, %v2349
    %v2368 = vrot.slane %v2367, 4
    %v2369 = vmax.f32 %v2367, %v2368
    %v2370 = vrot.slane %v2369, 2
    %v2371 = vmax.f32 %v2369, %v2370
    %v2372 = vrot.slane %v2371, 1
    %v2373 = vmax.f32 %v2371, %v2372
    %v2374 = vmax.f32 %v2326, %v2334
    %v2375 = vmax.f32 %v2374, %v2342
    %v2376 = vmax.f32 %v2375, %v2350
    %v2377 = vrot.slane %v2376, 4
    %v2378 = vmax.f32 %v2376, %v2377
    %v2379 = vrot.slane %v2378, 2
    %v2380 = vmax.f32 %v2378, %v2379
    %v2381 = vrot.slane %v2380, 1
    %v2382 = vmax.f32 %v2380, %v2381
    %v2383 = vmax.f32 %v2327, %v2335
    %v2384 = vmax.f32 %v2383, %v2343
    %v2385 = vmax.f32 %v2384, %v2351
    %v2386 = vrot.slane %v2385, 4
    %v2387 = vmax.f32 %v2385, %v2386
    %v2388 = vrot.slane %v2387, 2
    %v2389 = vmax.f32 %v2387, %v2388
    %v2390 = vrot.slane %v2389, 1
    %v2391 = vmax.f32 %v2389, %v2390
    %v2392 = vmax.f32 %v2328, %v2336
    %v2393 = vmax.f32 %v2392, %v2344
    %v2394 = vmax.f32 %v2393, %v2352
    %v2395 = vrot.slane %v2394, 4
    %v2396 = vmax.f32 %v2394, %v2395
    %v2397 = vrot.slane %v2396, 2
    %v2398 = vmax.f32 %v2396, %v2397
    %v2399 = vrot.slane %v2398, 1
    %v2400 = vmax.f32 %v2398, %v2399
    %v2401 = vmax.f32 %v2329, %v2337
    %v2402 = vmax.f32 %v2401, %v2345
    %v2403 = vmax.f32 %v2402, %v2353
    %v2404 = vrot.slane %v2403, 4
    %v2405 = vmax.f32 %v2403, %v2404
    %v2406 = vrot.slane %v2405, 2
    %v2407 = vmax.f32 %v2405, %v2406
    %v2408 = vrot.slane %v2407, 1
    %v2409 = vmax.f32 %v2407, %v2408
    %v2410 = vmax.f32 %v2330, %v2338
    %v2411 = vmax.f32 %v2410, %v2346
    %v2412 = vmax.f32 %v2411, %v2354
    %v2413 = vrot.slane %v2412, 4
    %v2414 = vmax.f32 %v2412, %v2413
    %v2415 = vrot.slane %v2414, 2
    %v2416 = vmax.f32 %v2414, %v2415
    %v2417 = vrot.slane %v2416, 1
    %v2418 = vmax.f32 %v2416, %v2417
    %v2419 = vmax.f32 %v2331, %v2339
    %v2420 = vmax.f32 %v2419, %v2347
    %v2421 = vmax.f32 %v2420, %v2355
    %v2422 = vrot.slane %v2421, 4
    %v2423 = vmax.f32 %v2421, %v2422
    %v2424 = vrot.slane %v2423, 2
    %v2425 = vmax.f32 %v2423, %v2424
    %v2426 = vrot.slane %v2425, 1
    %v2427 = vmax.f32 %v2425, %v2426
    %vm2428 = vcmp.eq.s32.totalorder %v1528, 7
    %vm2429 = vcmp.eq.s32.totalorder %v1529, 7
    %vm2430 = vcmp.eq.s32.totalorder %v1530, 7
    %vm2431 = vcmp.eq.s32.totalorder %v1531, 7
    %v2432 = vsel %vm2428, 1, 0
    %v2433 = vsel %vm2429, 1, 0
    %v2434 = vsel %vm2430, 1, 0
    %v2435 = vsel %vm2431, 1, 0
    %2436 = vset.pattern.permute.xlu0 0
    %2437 = vperm.xlu0 %2436, %v2432
    %v2438 = vpop.permute.xlu0 %2437
    %2439 = vset.pattern.permute.xlu0 0
    %2440 = vperm.xlu0 %2439, %v2433
    %v2441 = vpop.permute.xlu0 %2440
    %2442 = vset.pattern.permute.xlu0 0
    %2443 = vperm.xlu0 %2442, %v2434
    %v2444 = vpop.permute.xlu0 %2443
    %2445 = vset.pattern.permute.xlu0 0
    %2446 = vperm.xlu0 %2445, %v2435
    %v2447 = vpop.permute.xlu0 %2446
    %vm2448 = vcmp.eq.s32.totalorder %v2438, 1
    %vm2449 = vcmp.eq.s32.totalorder %v2441, 1
    %vm2450 = vcmp.eq.s32.totalorder %v2444, 1
    %vm2451 = vcmp.eq.s32.totalorder %v2447, 1
    %v2452 = vsel %vm2448, %v1452, -inf
    %v2453 = vsel %vm2448, %v1453, -inf
    %v2454 = vsel %vm2448, %v1454, -inf
    %v2455 = vsel %vm2448, %v1455, -inf
    %v2456 = vsel %vm2448, %v1456, -inf
    %v2457 = vsel %vm2448, %v1457, -inf
    %v2458 = vsel %vm2448, %v1458, -inf
    %v2459 = vsel %vm2448, %v1459, -inf
    %v2460 = vsel %vm2449, %v1460, -inf
    %v2461 = vsel %vm2449, %v1461, -inf
    %v2462 = vsel %vm2449, %v1462, -inf
    %v2463 = vsel %vm2449, %v1463, -inf
    %v2464 = vsel %vm2449, %v1464, -inf
    %v2465 = vsel %vm2449, %v1465, -inf
    %v2466 = vsel %vm2449, %v1466, -inf
    %v2467 = vsel %vm2449, %v1467, -inf
    %v2468 = vsel %vm2450, %v1468, -inf
    %v2469 = vsel %vm2450, %v1469, -inf
    %v2470 = vsel %vm2450, %v1470, -inf
    %v2471 = vsel %vm2450, %v1471, -inf
    %v2472 = vsel %vm2450, %v1472, -inf
    %v2473 = vsel %vm2450, %v1473, -inf
    %v2474 = vsel %vm2450, %v1474, -inf
    %v2475 = vsel %vm2450, %v1475, -inf
    %v2476 = vsel %vm2451, %v1476, -inf
    %v2477 = vsel %vm2451, %v1477, -inf
    %v2478 = vsel %vm2451, %v1478, -inf
    %v2479 = vsel %vm2451, %v1479, -inf
    %v2480 = vsel %vm2451, %v1480, -inf
    %v2481 = vsel %vm2451, %v1481, -inf
    %v2482 = vsel %vm2451, %v1482, -inf
    %v2483 = vsel %vm2451, %v1483, -inf
    %v2484 = vmax.f32 %v2452, %v2460
    %v2485 = vmax.f32 %v2484, %v2468
    %v2486 = vmax.f32 %v2485, %v2476
    %v2487 = vrot.slane %v2486, 4
    %v2488 = vmax.f32 %v2486, %v2487
    %v2489 = vrot.slane %v2488, 2
    %v2490 = vmax.f32 %v2488, %v2489
    %v2491 = vrot.slane %v2490, 1
    %v2492 = vmax.f32 %v2490, %v2491
    %v2493 = vmax.f32 %v2453, %v2461
    %v2494 = vmax.f32 %v2493, %v2469
    %v2495 = vmax.f32 %v2494, %v2477
    %v2496 = vrot.slane %v2495, 4
    %v2497 = vmax.f32 %v2495, %v2496
    %v2498 = vrot.slane %v2497, 2
    %v2499 = vmax.f32 %v2497, %v2498
    %v2500 = vrot.slane %v2499, 1
    %v2501 = vmax.f32 %v2499, %v2500
    %v2502 = vmax.f32 %v2454, %v2462
    %v2503 = vmax.f32 %v2502, %v2470
    %v2504 = vmax.f32 %v2503, %v2478
    %v2505 = vrot.slane %v2504, 4
    %v2506 = vmax.f32 %v2504, %v2505
    %v2507 = vrot.slane %v2506, 2
    %v2508 = vmax.f32 %v2506, %v2507
    %v2509 = vrot.slane %v2508, 1
    %v2510 = vmax.f32 %v2508, %v2509
    %v2511 = vmax.f32 %v2455, %v2463
    %v2512 = vmax.f32 %v2511, %v2471
    %v2513 = vmax.f32 %v2512, %v2479
    %v2514 = vrot.slane %v2513, 4
    %v2515 = vmax.f32 %v2513, %v2514
    %v2516 = vrot.slane %v2515, 2
    %v2517 = vmax.f32 %v2515, %v2516
    %v2518 = vrot.slane %v2517, 1
    %v2519 = vmax.f32 %v2517, %v2518
    %v2520 = vmax.f32 %v2456, %v2464
    %v2521 = vmax.f32 %v2520, %v2472
    %v2522 = vmax.f32 %v2521, %v2480
    %v2523 = vrot.slane %v2522, 4
    %v2524 = vmax.f32 %v2522, %v2523
    %v2525 = vrot.slane %v2524, 2
    %v2526 = vmax.f32 %v2524, %v2525
    %v2527 = vrot.slane %v2526, 1
    %v2528 = vmax.f32 %v2526, %v2527
    %v2529 = vmax.f32 %v2457, %v2465
    %v2530 = vmax.f32 %v2529, %v2473
    %v2531 = vmax.f32 %v2530, %v2481
    %v2532 = vrot.slane %v2531, 4
    %v2533 = vmax.f32 %v2531, %v2532
    %v2534 = vrot.slane %v2533, 2
    %v2535 = vmax.f32 %v2533, %v2534
    %v2536 = vrot.slane %v2535, 1
    %v2537 = vmax.f32 %v2535, %v2536
    %v2538 = vmax.f32 %v2458, %v2466
    %v2539 = vmax.f32 %v2538, %v2474
    %v2540 = vmax.f32 %v2539, %v2482
    %v2541 = vrot.slane %v2540, 4
    %v2542 = vmax.f32 %v2540, %v2541
    %v2543 = vrot.slane %v2542, 2
    %v2544 = vmax.f32 %v2542, %v2543
    %v2545 = vrot.slane %v2544, 1
    %v2546 = vmax.f32 %v2544, %v2545
    %v2547 = vmax.f32 %v2459, %v2467
    %v2548 = vmax.f32 %v2547, %v2475
    %v2549 = vmax.f32 %v2548, %v2483
    %v2550 = vrot.slane %v2549, 4
    %v2551 = vmax.f32 %v2549, %v2550
    %v2552 = vrot.slane %v2551, 2
    %v2553 = vmax.f32 %v2551, %v2552
    %v2554 = vrot.slane %v2553, 1
    %v2555 = vmax.f32 %v2553, %v2554
    %v2556 = vsel %vm217, %v1596, %v1724
    %v2557 = vsel %vm217, %v1605, %v1733
    %v2558 = vsel %vm217, %v1614, %v1742
    %v2559 = vsel %vm217, %v1623, %v1751
    %v2560 = vsel %vm217, %v1632, %v1760
    %v2561 = vsel %vm217, %v1641, %v1769
    %v2562 = vsel %vm217, %v1650, %v1778
    %v2563 = vsel %vm217, %v1659, %v1787
    %v2564 = vsel %vm218, %v2556, %v1852
    %v2565 = vsel %vm218, %v2557, %v1861
    %v2566 = vsel %vm218, %v2558, %v1870
    %v2567 = vsel %vm218, %v2559, %v1879
    %v2568 = vsel %vm218, %v2560, %v1888
    %v2569 = vsel %vm218, %v2561, %v1897
    %v2570 = vsel %vm218, %v2562, %v1906
    %v2571 = vsel %vm218, %v2563, %v1915
    %vm2572 = vcmask 1042432
    %v2573 = vsel %vm2572, %v2564, %v1980
    %v2574 = vsel %vm2572, %v2565, %v1989
    %v2575 = vsel %vm2572, %v2566, %v1998
    %v2576 = vsel %vm2572, %v2567, %v2007
    %v2577 = vsel %vm2572, %v2568, %v2016
    %v2578 = vsel %vm2572, %v2569, %v2025
    %v2579 = vsel %vm2572, %v2570, %v2034
    %v2580 = vsel %vm2572, %v2571, %v2043
    %vm2581 = vcmask 1043456
    %v2582 = vsel %vm2581, %v2573, %v2108
    %v2583 = vsel %vm2581, %v2574, %v2117
    %v2584 = vsel %vm2581, %v2575, %v2126
    %v2585 = vsel %vm2581, %v2576, %v2135
    %v2586 = vsel %vm2581, %v2577, %v2144
    %v2587 = vsel %vm2581, %v2578, %v2153
    %v2588 = vsel %vm2581, %v2579, %v2162
    %v2589 = vsel %vm2581, %v2580, %v2171
    %vm2590 = vcmask 1044480
    %v2591 = vsel %vm2590, %v2582, %v2236
    %v2592 = vsel %vm2590, %v2583, %v2245
    %v2593 = vsel %vm2590, %v2584, %v2254
    %v2594 = vsel %vm2590, %v2585, %v2263
    %v2595 = vsel %vm2590, %v2586, %v2272
    %v2596 = vsel %vm2590, %v2587, %v2281
    %v2597 = vsel %vm2590, %v2588, %v2290
    %v2598 = vsel %vm2590, %v2589, %v2299
    %vm2599 = vcmask 1045504
    %v2600 = vsel %vm2599, %v2591, %v2364
    %v2601 = vsel %vm2599, %v2592, %v2373
    %v2602 = vsel %vm2599, %v2593, %v2382
    %v2603 = vsel %vm2599, %v2594, %v2391
    %v2604 = vsel %vm2599, %v2595, %v2400
    %v2605 = vsel %vm2599, %v2596, %v2409
    %v2606 = vsel %vm2599, %v2597, %v2418
    %v2607 = vsel %vm2599, %v2598, %v2427
    %vm2608 = vcmask 1046528
    %v2609 = vsel %vm2608, %v2600, %v2492
    %v2610 = vsel %vm2608, %v2601, %v2501
    %v2611 = vsel %vm2608, %v2602, %v2510
    %v2612 = vsel %vm2608, %v2603, %v2519
    %v2613 = vsel %vm2608, %v2604, %v2528
    %v2614 = vsel %vm2608, %v2605, %v2537
    %v2615 = vsel %vm2608, %v2606, %v2546
    %v2616 = vsel %vm2608, %v2607, %v2555
    %v2617 = vld [vmem:[#allocation20] sm:$0xff]
    %v2618 = vld [vmem:[#allocation20 + $0x8] sm:$0xff]
    %v2619 = vld [vmem:[#allocation20 + $0x10] sm:$0xff]
    %v2620 = vld [vmem:[#allocation20 + $0x18] sm:$0xff]
    %v2621 = vld [vmem:[#allocation20 + $0x20] sm:$0xff]
    %v2622 = vld [vmem:[#allocation20 + $0x28] sm:$0xff]
    %v2623 = vld [vmem:[#allocation20 + $0x30] sm:$0xff]
    %v2624 = vld [vmem:[#allocation20 + $0x38] sm:$0xff]
    %v2625 = vmax.f32 %v2617, %v2609
    %v2626 = vmax.f32 %v2618, %v2610
    %v2627 = vmax.f32 %v2619, %v2611
    %v2628 = vmax.f32 %v2620, %v2612
    %v2629 = vmax.f32 %v2621, %v2613
    %v2630 = vmax.f32 %v2622, %v2614
    %v2631 = vmax.f32 %v2623, %v2615
    %v2632 = vmax.f32 %v2624, %v2616
    %2633 = vst [vmem:[#allocation20] sm:$0xff] %v2625
    %2634 = vst [vmem:[#allocation20 + $0x8] sm:$0xff] %v2626
    %2635 = vst [vmem:[#allocation20 + $0x10] sm:$0xff] %v2627
    %2636 = vst [vmem:[#allocation20 + $0x18] sm:$0xff] %v2628
    %2637 = vst [vmem:[#allocation20 + $0x20] sm:$0xff] %v2629
    %2638 = vst [vmem:[#allocation20 + $0x28] sm:$0xff] %v2630
    %2639 = vst [vmem:[#allocation20 + $0x30] sm:$0xff] %v2631
    %2640 = vst [vmem:[#allocation20 + $0x38] sm:$0xff] %v2632
    // Predicated region
    $region134: #{tpu_custom_call.1} parent=1 // pred_check
      _
    $region135: #{tpu_custom_call.1} parent=1 // pred_check_branch
      %2642 = sbr.rel (0) target = $region137
    $region136: #{tpu_custom_call.1} parent=1 // pred_region
      %s2644 = ssub.s32 4096, 4096
      %2645 = vsyncadd [#allocation4], %s2644
      %s2646 = sshll.u32 [#allocation19], 4
      %s2647 = int_to_ptr.vmem [resolvable:$true] %s2646
      %2652 = dma.vmem_to_hbm [thread:$0]  %s2647, 4096, %s22, [#allocation4], 1024, 1024, 64
    $region137: #{tpu_custom_call.1} parent=1 // pred_fallthru
      _
    // Predicated region
    $region138: #{tpu_custom_call.1} parent=1 // pred_check
      _
    $region139: #{tpu_custom_call.1} parent=1 // pred_check_branch
      %2654 = sbr.rel (0) target = $region141
    $region140: #{tpu_custom_call.1} parent=1 // pred_region
      %s2656 = ssub.s32 1024, 1024
      %2657 = vsyncadd [#allocation21], %s2656
      %s2659 = sshll.u32 [#allocation20], 4
      %s2660 = int_to_ptr.vmem [resolvable:$true] %s2659
      %2662 = dma.vmem_to_hbm [thread:$0]  %s2660, 1024, %s23, [#allocation21]
    $region141: #{tpu_custom_call.1} parent=1 // pred_fallthru
      _
    // Predicated region
    $region142: #{tpu_custom_call.1} parent=1 // pred_check
      _
    $region143: #{tpu_custom_call.1} parent=1 // pred_check_branch
      %2664 = sbr.rel (0) target = $region145
    $region144: #{tpu_custom_call.1} parent=1 // pred_region
      %2665 = dma.done [#allocation4], 4096
    $region145: #{tpu_custom_call.1} parent=1 // pred_fallthru
      _
    // Predicated region
    $region146: #{tpu_custom_call.1} parent=1 // pred_check
      _
    $region147: #{tpu_custom_call.1} parent=1 // pred_check_branch
      %2667 = sbr.rel (0) target = $region149
    $region148: #{tpu_custom_call.1} parent=1 // pred_region
      %2668 = dma.done [#allocation21], 1024
    $region149: #{tpu_custom_call.1} parent=1 // pred_fallthru
      _
    %2669 = vsyncpa [#allocation3], 1
    %2670 = vsyncpa [#allocation6], 1
    %2671 = vsyncpa [#allocation9], 1
    %2672 = vsyncpa [#allocation12], 1
    %2673 = vsyncpa [#allocation15], 1
    %2674 = vsyncpa [#allocation18], 1
    %2675 = vsyncpa [#allocation4], 1
    %2676 = vsyncpa [#allocation21], 1

</llo_original>
